<compile_context>
chip_gen: v5e
topology: v5e:2x2
jax: 0.10.0
libtpu: 0.0.40
codegen_flags: <defaults>
</compile_context>

<pallas_src>
import functools

import jax
import jax.numpy as jnp
from jax import lax
from jax.experimental import pallas as pl
from jax.experimental.pallas import tpu as pltpu


#            (Cin, Cout,  K, stride, pad, maxpool)
LAYER_CFG = [(1,   16,  64, 2, 32, 8),
             (16,  32,  32, 2, 16, 8),
             (32,  64,  16, 2,  8, None),
             (64, 128,   8, 2,  4, None)]

GROUP_SPAN = 128   # layer-1 patch width per pooled row (>= stride*(pool-1)+K = 78)


# ----------------------------------------------------------------------------
# Fused Pallas kernel: one grid step per batch element, everything in VMEM.
# ----------------------------------------------------------------------------
def _soundnet_kernel(
    # inputs
    wf_ref,                                  # (rows1, 16)      f32   padded waveform, 16-wide rows
    w1_ref,                                  # (128, pool1*C1)  bf16  block-packed conv1 weight
    w2_ref, w3_ref, w4_ref,                  # (K*Cin, Cout)    bf16  BN-scale-folded weights
    s1_ref, s2_ref, s3_ref, s4_ref,          # (1, Cout)        f32   folded BN shift
    # output
    out_ref,                                 # (Lout4, C4)      f32
    # scratch (VMEM)
    col1_ref,                                # (Lp1, 128)       f32   layer-1 group windows
    xp2_ref,                                 # (Lpad2, 128)     f32   lane-widened padded act (G=8)
    col2_ref,                                # (Lc2, K2*C1)     bf16  layer-2 im2col
    xp3_ref,                                 # (Lpad3, 128)     f32   (G=4)
    col3_ref,                                # (Lout3, K3*C2)   f32
    xp4_ref,                                 # (Lpad4, 128)     f32   (G=2)
    col4_ref,                                # (Lout4, K4*C3)   f32
    *, pool1, pool2, step1, strides):
  f32, bf16 = jnp.float32, jnp.bfloat16
  st2, st3, st4 = strides

  def conv_wide(a, xp_ref, col_ref, w_ref, stride):
    """Strided conv of a:(Lin,Cin) vs w:(K*Cin,Cout) as ONE deep MXU matmul.

    xp_ref is lane-widened: lane block g (of 128//Cin) holds the padded
    activation shifted down by g rows, so every im2col write below is a
    128-lane-dense slab covering 128//Cin taps, and only the pad head/tail
    rows need explicit zeroing (data writes overwrite the live interior).
    """
    lin, cin = a.shape
    lpad = xp_ref.shape[0]
    pad = (lpad - lin) // 2
    g = 128 // cin                            # taps packed per 128-lane group
    lout, kc = col_ref.shape
    n_grp = (kc // cin) // g
    assert 128 % cin == 0 and (kc // cin) % g == 0 and pad >= g - 1
    # zero only the pad head + tail rows (full 128 lanes), then write data.
    xp_ref[pl.ds(0, pad), :] = jnp.zeros((pad, 128), f32)
    tail = lin + pad - (g - 1)
    xp_ref[pl.ds(tail, lpad - tail), :] = jnp.zeros((lpad - tail, 128), f32)
    for gg in range(g):                       # static unroll: shifted copies
      xp_ref[pl.ds(pad - gg, lin), pl.ds(gg * cin, cin)] = a
    for kb in range(n_grp):                   # static unroll: lane-dense col fill
      blk = xp_ref[pl.ds(kb * g, lout, stride=stride), :]
      col_ref[:, pl.ds(kb * 128, 128)] = blk.astype(col_ref.dtype)
    return jnp.dot(col_ref[...].astype(bf16), w_ref[...],
                   preferred_element_type=f32)

  # ---- layer 1: in-kernel im2col from the raw waveform rows (read once from
  #      HBM), one wide (Lp1,128)x(128,128) MXU matmul whose 128 output lanes
  #      pack the whole 8-row pool window, then a lane roll-tree max-pool.
  lp1 = col1_ref.shape[0]
  n_wf = col1_ref.shape[1] // step1           # 8 shifted row views
  for j in range(n_wf):                       # static unroll
    col1_ref[:, pl.ds(j * step1, step1)] = wf_ref[pl.ds(j, lp1), :]
  y1p = jnp.dot(col1_ref[...].astype(bf16), w1_ref[...],
                preferred_element_type=f32)   # (Lp1, pool1*C1); lane j*C1+c = conv1[8p+j, c]
  c1 = s1_ref.shape[1]
  assert pool1 & (pool1 - 1) == 0 and y1p.shape[1] == pool1 * c1
  m = y1p
  sh = (pool1 * c1) // 2
  while sh >= c1:                             # cyclic roll-tree: max over lane groups of c1
    m = jnp.maximum(m, pltpu.roll(m, shift=sh, axis=1))
    sh //= 2
  a1 = jnp.maximum(m[:, :c1] + s1_ref[...], 0.0)                 # (Lp1, C1)

  # ---- layer 2: widened-xp conv, contiguous-group pool, shift + ReLU
  y2 = conv_wide(a1, xp2_ref, col2_ref, w2_ref, st2)             # (Lc2, C2)
  lp2 = y2.shape[0] // pool2
  p2 = jnp.max(y2.reshape(lp2, pool2, y2.shape[1]), axis=1)      # (Lp2, C2)
  a2 = jnp.maximum(p2 + s2_ref[...], 0.0)

  # ---- layer 3 (no pool)
  y3 = conv_wide(a2, xp3_ref, col3_ref, w3_ref, st3)             # (Lout3, C3)
  a3 = jnp.maximum(y3 + s3_ref[...], 0.0)

  # ---- layer 4 (no pool)
  y4 = conv_wide(a3, xp4_ref, col4_ref, w4_ref, st4)             # (Lout4, C4)
  out_ref[...] = jnp.maximum(y4 + s4_ref[...], 0.0)


# ----------------------------------------------------------------------------
# Wrapper: BN folding, weight packing, waveform layout, pallas_call glue.
# ----------------------------------------------------------------------------
def _fold_bn(p, eps):
  scale = p["gamma"] / jnp.sqrt(p["var"] + eps)
  shift = p["beta"] + (p["b"] - p["mean"]) * scale
  k, cin, cout = p["w"].shape
  w = (p["w"].reshape(k * cin, cout) * scale[None, :]).astype(jnp.bfloat16)
  return w, shift.reshape(1, cout).astype(jnp.float32)


def _pack_conv1_weight(p, eps, pool, stride, span):
  """Block-structured layer-1 weight so one matmul emits `pool` conv rows.

  W[t, j*C + c] = (w*scale)[t - stride*j, c] for 0 <= t - stride*j < K, else 0.
  """
  scale = p["gamma"] / jnp.sqrt(p["var"] + eps)
  shift = p["beta"] + (p["b"] - p["mean"]) * scale
  k, cin, cout = p["w"].shape                    # (64, 1, 16)
  ws = p["w"].reshape(k, cout) * scale[None, :]
  blk = jnp.zeros((span, pool, cout), jnp.float32)
  for j in range(pool):
    blk = blk.at[stride * j: stride * j + k, j, :].set(ws)
  return (blk.reshape(span, pool * cout).astype(jnp.bfloat16),
          shift.reshape(1, cout).astype(jnp.float32))


def soundnet_forward(waveform, params, eps=1e-5):
  # waveform: (B, 1, L) mono; PyTorch does unsqueeze(1).permute -> NCHW (B,1,L,1).
  B = waveform.shape[0]
  x = waveform.reshape(B, -1).astype(jnp.float32)          # (B, L)
  L = x.shape[1]

  (_, C1, K1, S1, P1, pool1), (_, C2, K2, S2, P2, pool2), \
      (_, C3, K3, S3, P3, _), (_, C4, K4, S4, P4, _) = LAYER_CFG

  # Static per-layer geometry (only rows the pools consume are computed).
  Lout1 = (L + 2 * P1 - K1) // S1 + 1
  Lp1 = Lout1 // pool1
  step1 = S1 * pool1                                        # 16 input samples / pooled row
  Lpad2 = Lp1 + 2 * P2
  Lout2 = (Lp1 + 2 * P2 - K2) // S2 + 1
  Lp2 = Lout2 // pool2
  Lc2 = Lp2 * pool2
  Lpad3 = Lp2 + 2 * P3
  Lout3 = (Lp2 + 2 * P3 - K3) // S3 + 1
  Lpad4 = Lout3 + 2 * P4
  Lout4 = (Lout3 + 2 * P4 - K4) // S4 + 1

  # Ship the waveform ONCE: pad and reshape to 16-wide rows (pure input layout,
  # no im2col inflation in HBM).  The kernel rebuilds the patch block in VMEM.
  rows1 = Lp1 + GROUP_SPAN // step1 - 1                     # e.g. 71 at L=1024
  need = rows1 * step1
  xpad = jnp.pad(x, ((0, 0), (P1, need - L - P1)))          # extra tail zeros hit
  wf = xpad.reshape(B, rows1, step1)                        # zero weight rows only

  w1, s1 = _pack_conv1_weight(params[0], eps, pool1, S1, GROUP_SPAN)
  (w2, s2), (w3, s3), (w4, s4) = [_fold_bn(p, eps) for p in params[1:]]

  kernel = functools.partial(
      _soundnet_kernel, pool1=pool1, pool2=pool2, step1=step1,
      strides=(S2, S3, S4))

  out = pl.pallas_call(
      kernel,
      out_shape=jax.ShapeDtypeStruct((B, Lout4, C4), jnp.float32),
      grid=(B,),
      in_specs=[
          pl.BlockSpec((None, rows1, step1), lambda b: (b, 0, 0)),   # waveform rows
          pl.BlockSpec((GROUP_SPAN, pool1 * C1), lambda b: (0, 0)),  # packed w1
          pl.BlockSpec((K2 * C1, C2), lambda b: (0, 0)),             # w2
          pl.BlockSpec((K3 * C2, C3), lambda b: (0, 0)),             # w3
          pl.BlockSpec((K4 * C3, C4), lambda b: (0, 0)),             # w4
          pl.BlockSpec((1, C1), lambda b: (0, 0)),                   # shift1
          pl.BlockSpec((1, C2), lambda b: (0, 0)),                   # shift2
          pl.BlockSpec((1, C3), lambda b: (0, 0)),                   # shift3
          pl.BlockSpec((1, C4), lambda b: (0, 0)),                   # shift4
      ],
      out_specs=pl.BlockSpec((None, Lout4, C4), lambda b: (b, 0, 0)),
      scratch_shapes=[
          pltpu.VMEM((Lp1, GROUP_SPAN), jnp.float32),                # col1
          pltpu.VMEM((Lpad2, 128), jnp.float32),                     # xp2 (widened)
          pltpu.VMEM((Lc2, K2 * C1), jnp.bfloat16),                  # col2
          pltpu.VMEM((Lpad3, 128), jnp.float32),                     # xp3 (widened)
          pltpu.VMEM((Lout3, K3 * C2), jnp.float32),                 # col3 (tiny)
          pltpu.VMEM((Lpad4, 128), jnp.float32),                     # xp4 (widened)
          pltpu.VMEM((Lout4, K4 * C3), jnp.float32),                 # col4 (tiny)
      ],
      compiler_params=pltpu.CompilerParams(
          dimension_semantics=("parallel",)),                        # keep B even on v7x
  )(wf, w1, w2, w3, w4, s1, s2, s3, s4)

  # PyTorch: x.reshape(B, -1) on (B, C, L, 1) -> channel-major flatten.
  return jnp.transpose(out, (0, 2, 1)).reshape(B, -1)


# ----------------------------------------------------------------------------
# Pure-XLA reference (same bf16 operand quantisation as the kernel).
# ----------------------------------------------------------------------------
def reference_forward(waveform, params, eps=1e-5):
  B = waveform.shape[0]
  x = waveform.reshape(B, -1).astype(jnp.float32)[:, :, None]    # (B, L, 1)
  for (cin, cout, k, stride, pad, pool), p in zip(LAYER_CFG, params):
    scale = p["gamma"] / jnp.sqrt(p["var"] + eps)
    shift = p["beta"] + (p["b"] - p["mean"]) * scale
    wq = (p["w"] * scale[None, None, :]).astype(jnp.bfloat16).astype(jnp.float32)
    xq = x.astype(jnp.bfloat16).astype(jnp.float32)
    y = lax.conv_general_dilated(
        xq, wq, window_strides=(stride,), padding=[(pad, pad)],
        dimension_numbers=("NWC", "WIO", "NWC"))
    y = jnp.maximum(y + shift[None, None, :], 0.0)
    if pool is not None:
      lp = y.shape[1] // pool
      y = y[:, :lp * pool, :].reshape(B, lp, pool, cout).max(axis=2)
    x = y
  return jnp.transpose(x, (0, 2, 1)).reshape(B, -1)


# ----------------------------------------------------------------------------
# Deterministic parameter init (same scheme as before).
# ----------------------------------------------------------------------------
def init_params(key):
  params = []
  for (cin, cout, k, _stride, _pad, _pool) in LAYER_CFG:
    key, k1, k2, k3, k4, k5, k6 = jax.random.split(key, 7)
    fan_in = float(k * cin)
    params.append(dict(
        w=jax.random.normal(k1, (k, cin, cout), jnp.float32) * (fan_in ** -0.5),
        b=jax.random.normal(k2, (cout,), jnp.float32) * 0.05,
        gamma=jax.random.uniform(k3, (cout,), jnp.float32, 0.5, 1.5),
        beta=jax.random.normal(k4, (cout,), jnp.float32) * 0.05,
        mean=jax.random.normal(k5, (cout,), jnp.float32) * 0.05,
        var=jax.random.uniform(k6, (cout,), jnp.float32, 0.5, 1.5),
    ))
  return params


if __name__ == "__main__":
  key = jax.random.PRNGKey(0)
  kp, kx = jax.random.split(key)
  params = init_params(kp)

  B, L = 2, 1024
  waveform = jax.random.normal(kx, (B, 1, L), jnp.float32)

  out = jax.jit(lambda w: soundnet_forward(w, params))(waveform)
  jax.block_until_ready(out)

  # L=1024 -> conv1 513 -> pool 64 -> conv2 33 -> pool 4 -> conv3 3 -> conv4 2
  assert out.shape == (B, 256), out.shape
  assert bool(jnp.all(jnp.isfinite(out)))

  ref = jax.jit(lambda w: reference_forward(w, params))(waveform)
  err = float(jnp.max(jnp.abs(out - ref)))
  tol = 5e-2 * (1.0 + float(jnp.max(jnp.abs(ref))))
  assert err <= tol, (err, tol)

  print("KERNEL_OK")
</pallas_src>

<mosaic_0001>
module attributes {stable_mosaic.version = 11 : i64} {
  func.func @_soundnet_kernel(%arg0: i32, %arg1: memref<1x71x16xf32, #tpu.memory_space<vmem>>, %arg2: memref<128x128xbf16, #tpu.memory_space<vmem>>, %arg3: memref<512x32xbf16, #tpu.memory_space<vmem>>, %arg4: memref<512x64xbf16, #tpu.memory_space<vmem>>, %arg5: memref<512x128xbf16, #tpu.memory_space<vmem>>, %arg6: memref<1x16xf32, #tpu.memory_space<vmem>>, %arg7: memref<1x32xf32, #tpu.memory_space<vmem>>, %arg8: memref<1x64xf32, #tpu.memory_space<vmem>>, %arg9: memref<1x128xf32, #tpu.memory_space<vmem>>, %arg10: memref<1x2x128xf32, #tpu.memory_space<vmem>>, %arg11: memref<64x128xf32, #tpu.memory_space<vmem>>, %arg12: memref<96x128xf32, #tpu.memory_space<vmem>>, %arg13: memref<32x512xbf16, #tpu.memory_space<vmem>>, %arg14: memref<20x128xf32, #tpu.memory_space<vmem>>, %arg15: memref<3x512xf32, #tpu.memory_space<vmem>>, %arg16: memref<11x128xf32, #tpu.memory_space<vmem>>, %arg17: memref<2x512xf32, #tpu.memory_space<vmem>>) attributes {dimension_semantics = [#tpu.dimension_semantics<parallel>], iteration_bounds = array<i64: 2>, scalar_prefetch = 0 : i64, scratch_operands = 7 : i64, tpu.core_type = #tpu.core_type<tc>, window_params = [{transform_indices = @transform_0, window_bounds = array<i64: 1, 71, 16>}, {pipeline_mode = #tpu.pipeline_mode<synchronous>, transform_indices = @transform_1, window_bounds = array<i64: 128, 128>}, {pipeline_mode = #tpu.pipeline_mode<synchronous>, transform_indices = @transform_2, window_bounds = array<i64: 512, 32>}, {pipeline_mode = #tpu.pipeline_mode<synchronous>, transform_indices = @transform_3, window_bounds = array<i64: 512, 64>}, {pipeline_mode = #tpu.pipeline_mode<synchronous>, transform_indices = @transform_4, window_bounds = array<i64: 512, 128>}, {pipeline_mode = #tpu.pipeline_mode<synchronous>, transform_indices = @transform_5, window_bounds = array<i64: 1, 16>}, {pipeline_mode = #tpu.pipeline_mode<synchronous>, transform_indices = @transform_6, window_bounds = array<i64: 1, 32>}, {pipeline_mode = #tpu.pipeline_mode<synchronous>, transform_indices = @transform_7, window_bounds = array<i64: 1, 64>}, {pipeline_mode = #tpu.pipeline_mode<synchronous>, transform_indices = @transform_8, window_bounds = array<i64: 1, 128>}, {transform_indices = @transform_9, window_bounds = array<i64: 1, 2, 128>}]} {
    %c0 = arith.constant 0 : index
    %c0_0 = arith.constant 0 : index
    %c0_1 = arith.constant 0 : index
    %0 = vector.load %arg1[%c0, %c0_0, %c0_1] : memref<1x71x16xf32, #tpu.memory_space<vmem>>, vector<1x64x16xf32>
    %1 = vector.shape_cast %0 : vector<1x64x16xf32> to vector<64x16xf32>
    %c0_2 = arith.constant 0 : index
    %c0_3 = arith.constant 0 : index
    %2 = vector.load %arg11[%c0_2, %c0_3] : memref<64x128xf32, #tpu.memory_space<vmem>>, vector<64x16xf32>
    tpu.vector_store %arg11[%c0_2, %c0_3], %1 {strides = array<i32>} : memref<64x128xf32, #tpu.memory_space<vmem>>, vector<64x16xf32>,
    %c0_4 = arith.constant 0 : index
    %c1 = arith.constant 1 : index
    %c0_5 = arith.constant 0 : index
    %3 = vector.load %arg1[%c0_4, %c1, %c0_5] : memref<1x71x16xf32, #tpu.memory_space<vmem>>, vector<1x64x16xf32>
    %4 = vector.shape_cast %3 : vector<1x64x16xf32> to vector<64x16xf32>
    %c0_6 = arith.constant 0 : index
    %c16 = arith.constant 16 : index
    %5 = vector.load %arg11[%c0_6, %c16] : memref<64x128xf32, #tpu.memory_space<vmem>>, vector<64x16xf32>
    tpu.vector_store %arg11[%c0_6, %c16], %4 {strides = array<i32>} : memref<64x128xf32, #tpu.memory_space<vmem>>, vector<64x16xf32>,
    %c0_7 = arith.constant 0 : index
    %c2 = arith.constant 2 : index
    %c0_8 = arith.constant 0 : index
    %6 = vector.load %arg1[%c0_7, %c2, %c0_8] : memref<1x71x16xf32, #tpu.memory_space<vmem>>, vector<1x64x16xf32>
    %7 = vector.shape_cast %6 : vector<1x64x16xf32> to vector<64x16xf32>
    %c0_9 = arith.constant 0 : index
    %c32 = arith.constant 32 : index
    %8 = vector.load %arg11[%c0_9, %c32] : memref<64x128xf32, #tpu.memory_space<vmem>>, vector<64x16xf32>
    tpu.vector_store %arg11[%c0_9, %c32], %7 {strides = array<i32>} : memref<64x128xf32, #tpu.memory_space<vmem>>, vector<64x16xf32>,
    %c0_10 = arith.constant 0 : index
    %c3 = arith.constant 3 : index
    %c0_11 = arith.constant 0 : index
    %9 = vector.load %arg1[%c0_10, %c3, %c0_11] : memref<1x71x16xf32, #tpu.memory_space<vmem>>, vector<1x64x16xf32>
    %10 = vector.shape_cast %9 : vector<1x64x16xf32> to vector<64x16xf32>
    %c0_12 = arith.constant 0 : index
    %c48 = arith.constant 48 : index
    %11 = vector.load %arg11[%c0_12, %c48] : memref<64x128xf32, #tpu.memory_space<vmem>>, vector<64x16xf32>
    tpu.vector_store %arg11[%c0_12, %c48], %10 {strides = array<i32>} : memref<64x128xf32, #tpu.memory_space<vmem>>, vector<64x16xf32>,
    %c0_13 = arith.constant 0 : index
    %c4 = arith.constant 4 : index
    %c0_14 = arith.constant 0 : index
    %12 = vector.load %arg1[%c0_13, %c4, %c0_14] : memref<1x71x16xf32, #tpu.memory_space<vmem>>, vector<1x64x16xf32>
    %13 = vector.shape_cast %12 : vector<1x64x16xf32> to vector<64x16xf32>
    %c0_15 = arith.constant 0 : index
    %c64 = arith.constant 64 : index
    %14 = vector.load %arg11[%c0_15, %c64] : memref<64x128xf32, #tpu.memory_space<vmem>>, vector<64x16xf32>
    tpu.vector_store %arg11[%c0_15, %c64], %13 {strides = array<i32>} : memref<64x128xf32, #tpu.memory_space<vmem>>, vector<64x16xf32>,
    %c0_16 = arith.constant 0 : index
    %c5 = arith.constant 5 : index
    %c0_17 = arith.constant 0 : index
    %15 = vector.load %arg1[%c0_16, %c5, %c0_17] : memref<1x71x16xf32, #tpu.memory_space<vmem>>, vector<1x64x16xf32>
    %16 = vector.shape_cast %15 : vector<1x64x16xf32> to vector<64x16xf32>
    %c0_18 = arith.constant 0 : index
    %c80 = arith.constant 80 : index
    %17 = vector.load %arg11[%c0_18, %c80] : memref<64x128xf32, #tpu.memory_space<vmem>>, vector<64x16xf32>
    tpu.vector_store %arg11[%c0_18, %c80], %16 {strides = array<i32>} : memref<64x128xf32, #tpu.memory_space<vmem>>, vector<64x16xf32>,
    %c0_19 = arith.constant 0 : index
    %c6 = arith.constant 6 : index
    %c0_20 = arith.constant 0 : index
    %18 = vector.load %arg1[%c0_19, %c6, %c0_20] : memref<1x71x16xf32, #tpu.memory_space<vmem>>, vector<1x64x16xf32>
    %19 = vector.shape_cast %18 : vector<1x64x16xf32> to vector<64x16xf32>
    %c0_21 = arith.constant 0 : index
    %c96 = arith.constant 96 : index
    %20 = vector.load %arg11[%c0_21, %c96] : memref<64x128xf32, #tpu.memory_space<vmem>>, vector<64x16xf32>
    tpu.vector_store %arg11[%c0_21, %c96], %19 {strides = array<i32>} : memref<64x128xf32, #tpu.memory_space<vmem>>, vector<64x16xf32>,
    %c0_22 = arith.constant 0 : index
    %c7 = arith.constant 7 : index
    %c0_23 = arith.constant 0 : index
    %21 = vector.load %arg1[%c0_22, %c7, %c0_23] : memref<1x71x16xf32, #tpu.memory_space<vmem>>, vector<1x64x16xf32>
    %22 = vector.shape_cast %21 : vector<1x64x16xf32> to vector<64x16xf32>
    %c0_24 = arith.constant 0 : index
    %c112 = arith.constant 112 : index
    %23 = vector.load %arg11[%c0_24, %c112] : memref<64x128xf32, #tpu.memory_space<vmem>>, vector<64x16xf32>
    tpu.vector_store %arg11[%c0_24, %c112], %22 {strides = array<i32>} : memref<64x128xf32, #tpu.memory_space<vmem>>, vector<64x16xf32>,
    %c0_25 = arith.constant 0 : index
    %c0_26 = arith.constant 0 : index
    %24 = vector.load %arg11[%c0_25, %c0_26] : memref<64x128xf32, #tpu.memory_space<vmem>>, vector<64x128xf32>
    %25 = arith.truncf %24 : vector<64x128xf32> to vector<64x128xbf16>
    %c0_27 = arith.constant 0 : index
    %c0_28 = arith.constant 0 : index
    %26 = vector.load %arg2[%c0_27, %c0_28] : memref<128x128xbf16, #tpu.memory_space<vmem>>, vector<128x128xbf16>
    %cst = arith.constant dense<0.000000e+00> : vector<64x128xf32>
    %27 = tpu.matmul %25, %26, %cst {dimension_numbers = #tpu.dot_dimension_numbers<[1], [0], [0], [1], [0, 0, 1, 1], [], []>} : vector<64x128xbf16>, vector<128x128xbf16>, vector<64x128xf32> -> vector<64x128xf32>
    %c64_i32 = arith.constant 64 : i32
    %28 = tpu.dynamic_rotate %27 by %c64_i32 dim 1 : vector<64x128xf32>, i32 -> vector<64x128xf32>
    %29 = arith.maximumf %27, %28 : vector<64x128xf32>
    %c32_i32 = arith.constant 32 : i32
    %30 = tpu.dynamic_rotate %29 by %c32_i32 dim 1 : vector<64x128xf32>, i32 -> vector<64x128xf32>
    %31 = arith.maximumf %29, %30 : vector<64x128xf32>
    %c16_i32 = arith.constant 16 : i32
    %32 = tpu.dynamic_rotate %31 by %c16_i32 dim 1 : vector<64x128xf32>, i32 -> vector<64x128xf32>
    %33 = arith.maximumf %31, %32 : vector<64x128xf32>
    %34 = vector.extract_strided_slice %33 {offsets = [0, 0], sizes = [64, 16], strides = [1, 1]} : vector<64x128xf32> to vector<64x16xf32>
    %c0_29 = arith.constant 0 : index
    %c0_30 = arith.constant 0 : index
    %35 = vector.load %arg6[%c0_29, %c0_30] : memref<1x16xf32, #tpu.memory_space<vmem>>, vector<1x16xf32>
    %36 = vector.broadcast %35 : vector<1x16xf32> to vector<64x16xf32>
    %37 = arith.addf %34, %36 : vector<64x16xf32>
    %cst_31 = arith.constant 0.000000e+00 : f32
    %38 = vector.broadcast %cst_31 : f32 to vector<64x16xf32>
    %39 = arith.maximumf %37, %38 : vector<64x16xf32>
    %cst_32 = arith.constant 0.000000e+00 : f32
    %40 = vector.broadcast %cst_32 : f32 to vector<16x128xf32>
    %c0_33 = arith.constant 0 : index
    %c0_34 = arith.constant 0 : index
    %41 = vector.load %arg12[%c0_33, %c0_34] : memref<96x128xf32, #tpu.memory_space<vmem>>, vector<16x128xf32>
    tpu.vector_store %arg12[%c0_33, %c0_34], %40 {strides = array<i32>} : memref<96x128xf32, #tpu.memory_space<vmem>>, vector<16x128xf32>,
    %cst_35 = arith.constant 0.000000e+00 : f32
    %42 = vector.broadcast %cst_35 : f32 to vector<23x128xf32>
    %c73 = arith.constant 73 : index
    %c0_36 = arith.constant 0 : index
    %43 = vector.load %arg12[%c73, %c0_36] : memref<96x128xf32, #tpu.memory_space<vmem>>, vector<23x128xf32>
    tpu.vector_store %arg12[%c73, %c0_36], %42 {strides = array<i32>} : memref<96x128xf32, #tpu.memory_space<vmem>>, vector<23x128xf32>,
    %c16_37 = arith.constant 16 : index
    %c0_38 = arith.constant 0 : index
    %44 = vector.load %arg12[%c16_37, %c0_38] : memref<96x128xf32, #tpu.memory_space<vmem>>, vector<64x16xf32>
    tpu.vector_store %arg12[%c16_37, %c0_38], %39 {strides = array<i32>} : memref<96x128xf32, #tpu.memory_space<vmem>>, vector<64x16xf32>,
    %c15 = arith.constant 15 : index
    %c16_39 = arith.constant 16 : index
    %45 = vector.load %arg12[%c15, %c16_39] : memref<96x128xf32, #tpu.memory_space<vmem>>, vector<64x16xf32>
    tpu.vector_store %arg12[%c15, %c16_39], %39 {strides = array<i32>} : memref<96x128xf32, #tpu.memory_space<vmem>>, vector<64x16xf32>,
    %c14 = arith.constant 14 : index
    %c32_40 = arith.constant 32 : index
    %46 = vector.load %arg12[%c14, %c32_40] : memref<96x128xf32, #tpu.memory_space<vmem>>, vector<64x16xf32>
    tpu.vector_store %arg12[%c14, %c32_40], %39 {strides = array<i32>} : memref<96x128xf32, #tpu.memory_space<vmem>>, vector<64x16xf32>,
    %c13 = arith.constant 13 : index
    %c48_41 = arith.constant 48 : index
    %47 = vector.load %arg12[%c13, %c48_41] : memref<96x128xf32, #tpu.memory_space<vmem>>, vector<64x16xf32>
    tpu.vector_store %arg12[%c13, %c48_41], %39 {strides = array<i32>} : memref<96x128xf32, #tpu.memory_space<vmem>>, vector<64x16xf32>,
    %c12 = arith.constant 12 : index
    %c64_42 = arith.constant 64 : index
    %48 = vector.load %arg12[%c12, %c64_42] : memref<96x128xf32, #tpu.memory_space<vmem>>, vector<64x16xf32>
    tpu.vector_store %arg12[%c12, %c64_42], %39 {strides = array<i32>} : memref<96x128xf32, #tpu.memory_space<vmem>>, vector<64x16xf32>,
    %c11 = arith.constant 11 : index
    %c80_43 = arith.constant 80 : index
    %49 = vector.load %arg12[%c11, %c80_43] : memref<96x128xf32, #tpu.memory_space<vmem>>, vector<64x16xf32>
    tpu.vector_store %arg12[%c11, %c80_43], %39 {strides = array<i32>} : memref<96x128xf32, #tpu.memory_space<vmem>>, vector<64x16xf32>,
    %c10 = arith.constant 10 : index
    %c96_44 = arith.constant 96 : index
    %50 = vector.load %arg12[%c10, %c96_44] : memref<96x128xf32, #tpu.memory_space<vmem>>, vector<64x16xf32>
    tpu.vector_store %arg12[%c10, %c96_44], %39 {strides = array<i32>} : memref<96x128xf32, #tpu.memory_space<vmem>>, vector<64x16xf32>,
    %c9 = arith.constant 9 : index
    %c112_45 = arith.constant 112 : index
    %51 = vector.load %arg12[%c9, %c112_45] : memref<96x128xf32, #tpu.memory_space<vmem>>, vector<64x16xf32>
    tpu.vector_store %arg12[%c9, %c112_45], %39 {strides = array<i32>} : memref<96x128xf32, #tpu.memory_space<vmem>>, vector<64x16xf32>,
    %c0_46 = arith.constant 0 : index
    %c0_47 = arith.constant 0 : index
    %52 = tpu.strided_load %arg12[%c0_46, %c0_47] {strides = array<i32: 2, 1>} : memref<96x128xf32, #tpu.memory_space<vmem>>, vector<32x128xf32>
    %53 = arith.truncf %52 : vector<32x128xf32> to vector<32x128xbf16>
    %c0_48 = arith.constant 0 : index
    %c0_49 = arith.constant 0 : index
    %54 = vector.load %arg13[%c0_48, %c0_49] : memref<32x512xbf16, #tpu.memory_space<vmem>>, vector<32x128xbf16>
    tpu.vector_store %arg13[%c0_48, %c0_49], %53 {strides = array<i32>} : memref<32x512xbf16, #tpu.memory_space<vmem>>, vector<32x128xbf16>,
    %c8 = arith.constant 8 : index
    %c0_50 = arith.constant 0 : index
    %55 = tpu.strided_load %arg12[%c8, %c0_50] {strides = array<i32: 2, 1>} : memref<96x128xf32, #tpu.memory_space<vmem>>, vector<32x128xf32>
    %56 = arith.truncf %55 : vector<32x128xf32> to vector<32x128xbf16>
    %c0_51 = arith.constant 0 : index
    %c128 = arith.constant 128 : index
    %57 = vector.load %arg13[%c0_51, %c128] : memref<32x512xbf16, #tpu.memory_space<vmem>>, vector<32x128xbf16>
    tpu.vector_store %arg13[%c0_51, %c128], %56 {strides = array<i32>} : memref<32x512xbf16, #tpu.memory_space<vmem>>, vector<32x128xbf16>,
    %c16_52 = arith.constant 16 : index
    %c0_53 = arith.constant 0 : index
    %58 = tpu.strided_load %arg12[%c16_52, %c0_53] {strides = array<i32: 2, 1>} : memref<96x128xf32, #tpu.memory_space<vmem>>, vector<32x128xf32>
    %59 = arith.truncf %58 : vector<32x128xf32> to vector<32x128xbf16>
    %c0_54 = arith.constant 0 : index
    %c256 = arith.constant 256 : index
    %60 = vector.load %arg13[%c0_54, %c256] : memref<32x512xbf16, #tpu.memory_space<vmem>>, vector<32x128xbf16>
    tpu.vector_store %arg13[%c0_54, %c256], %59 {strides = array<i32>} : memref<32x512xbf16, #tpu.memory_space<vmem>>, vector<32x128xbf16>,
    %c24 = arith.constant 24 : index
    %c0_55 = arith.constant 0 : index
    %61 = tpu.strided_load %arg12[%c24, %c0_55] {strides = array<i32: 2, 1>} : memref<96x128xf32, #tpu.memory_space<vmem>>, vector<32x128xf32>
    %62 = arith.truncf %61 : vector<32x128xf32> to vector<32x128xbf16>
    %c0_56 = arith.constant 0 : index
    %c384 = arith.constant 384 : index
    %63 = vector.load %arg13[%c0_56, %c384] : memref<32x512xbf16, #tpu.memory_space<vmem>>, vector<32x128xbf16>
    tpu.vector_store %arg13[%c0_56, %c384], %62 {strides = array<i32>} : memref<32x512xbf16, #tpu.memory_space<vmem>>, vector<32x128xbf16>,
    %c0_57 = arith.constant 0 : index
    %c0_58 = arith.constant 0 : index
    %64 = vector.load %arg13[%c0_57, %c0_58] : memref<32x512xbf16, #tpu.memory_space<vmem>>, vector<32x512xbf16>
    %c0_59 = arith.constant 0 : index
    %c0_60 = arith.constant 0 : index
    %65 = vector.load %arg3[%c0_59, %c0_60] : memref<512x32xbf16, #tpu.memory_space<vmem>>, vector<512x32xbf16>
    %cst_61 = arith.constant dense<0.000000e+00> : vector<32x32xf32>
    %66 = tpu.matmul %64, %65, %cst_61 {dimension_numbers = #tpu.dot_dimension_numbers<[1], [0], [0], [1], [0, 0, 1, 1], [], []>} : vector<32x512xbf16>, vector<512x32xbf16>, vector<32x32xf32> -> vector<32x32xf32>
    %67 = vector.shape_cast %66 : vector<32x32xf32> to vector<4x8x32xf32>
    %cst_62 = arith.constant dense<0xFF800000> : vector<4x32xf32>
    %68 = vector.multi_reduction <maximumf>, %67, %cst_62 [1] : vector<4x8x32xf32> to vector<4x32xf32>
    %c0_63 = arith.constant 0 : index
    %c0_64 = arith.constant 0 : index
    %69 = vector.load %arg7[%c0_63, %c0_64] : memref<1x32xf32, #tpu.memory_space<vmem>>, vector<1x32xf32>
    %70 = vector.broadcast %69 : vector<1x32xf32> to vector<4x32xf32>
    %71 = arith.addf %68, %70 : vector<4x32xf32>
    %cst_65 = arith.constant 0.000000e+00 : f32
    %72 = vector.broadcast %cst_65 : f32 to vector<4x32xf32>
    %73 = arith.maximumf %71, %72 : vector<4x32xf32>
    %cst_66 = arith.constant 0.000000e+00 : f32
    %74 = vector.broadcast %cst_66 : f32 to vector<8x128xf32>
    %c0_67 = arith.constant 0 : index
    %c0_68 = arith.constant 0 : index
    %75 = vector.load %arg14[%c0_67, %c0_68] : memref<20x128xf32, #tpu.memory_space<vmem>>, vector<8x128xf32>
    tpu.vector_store %arg14[%c0_67, %c0_68], %74 {strides = array<i32>} : memref<20x128xf32, #tpu.memory_space<vmem>>, vector<8x128xf32>,
    %cst_69 = arith.constant 0.000000e+00 : f32
    %76 = vector.broadcast %cst_69 : f32 to vector<11x128xf32>
    %c9_70 = arith.constant 9 : index
    %c0_71 = arith.constant 0 : index
    %77 = vector.load %arg14[%c9_70, %c0_71] : memref<20x128xf32, #tpu.memory_space<vmem>>, vector<11x128xf32>
    tpu.vector_store %arg14[%c9_70, %c0_71], %76 {strides = array<i32>} : memref<20x128xf32, #tpu.memory_space<vmem>>, vector<11x128xf32>,
    %c8_72 = arith.constant 8 : index
    %c0_73 = arith.constant 0 : index
    %78 = vector.load %arg14[%c8_72, %c0_73] : memref<20x128xf32, #tpu.memory_space<vmem>>, vector<4x32xf32>
    tpu.vector_store %arg14[%c8_72, %c0_73], %73 {strides = array<i32>} : memref<20x128xf32, #tpu.memory_space<vmem>>, vector<4x32xf32>,
    %c7_74 = arith.constant 7 : index
    %c32_75 = arith.constant 32 : index
    %79 = vector.load %arg14[%c7_74, %c32_75] : memref<20x128xf32, #tpu.memory_space<vmem>>, vector<4x32xf32>
    tpu.vector_store %arg14[%c7_74, %c32_75], %73 {strides = array<i32>} : memref<20x128xf32, #tpu.memory_space<vmem>>, vector<4x32xf32>,
    %c6_76 = arith.constant 6 : index
    %c64_77 = arith.constant 64 : index
    %80 = vector.load %arg14[%c6_76, %c64_77] : memref<20x128xf32, #tpu.memory_space<vmem>>, vector<4x32xf32>
    tpu.vector_store %arg14[%c6_76, %c64_77], %73 {strides = array<i32>} : memref<20x128xf32, #tpu.memory_space<vmem>>, vector<4x32xf32>,
    %c5_78 = arith.constant 5 : index
    %c96_79 = arith.constant 96 : index
    %81 = vector.load %arg14[%c5_78, %c96_79] : memref<20x128xf32, #tpu.memory_space<vmem>>, vector<4x32xf32>
    tpu.vector_store %arg14[%c5_78, %c96_79], %73 {strides = array<i32>} : memref<20x128xf32, #tpu.memory_space<vmem>>, vector<4x32xf32>,
    %c0_80 = arith.constant 0 : index
    %c0_81 = arith.constant 0 : index
    %82 = tpu.strided_load %arg14[%c0_80, %c0_81] {strides = array<i32: 2, 1>} : memref<20x128xf32, #tpu.memory_space<vmem>>, vector<3x128xf32>
    %c0_82 = arith.constant 0 : index
    %c0_83 = arith.constant 0 : index
    %83 = vector.load %arg15[%c0_82, %c0_83] : memref<3x512xf32, #tpu.memory_space<vmem>>, vector<3x128xf32>
    tpu.vector_store %arg15[%c0_82, %c0_83], %82 {strides = array<i32>} : memref<3x512xf32, #tpu.memory_space<vmem>>, vector<3x128xf32>,
    %c4_84 = arith.constant 4 : index
    %c0_85 = arith.constant 0 : index
    %84 = tpu.strided_load %arg14[%c4_84, %c0_85] {strides = array<i32: 2, 1>} : memref<20x128xf32, #tpu.memory_space<vmem>>, vector<3x128xf32>
    %c0_86 = arith.constant 0 : index
    %c128_87 = arith.constant 128 : index
    %85 = vector.load %arg15[%c0_86, %c128_87] : memref<3x512xf32, #tpu.memory_space<vmem>>, vector<3x128xf32>
    tpu.vector_store %arg15[%c0_86, %c128_87], %84 {strides = array<i32>} : memref<3x512xf32, #tpu.memory_space<vmem>>, vector<3x128xf32>,
    %c8_88 = arith.constant 8 : index
    %c0_89 = arith.constant 0 : index
    %86 = tpu.strided_load %arg14[%c8_88, %c0_89] {strides = array<i32: 2, 1>} : memref<20x128xf32, #tpu.memory_space<vmem>>, vector<3x128xf32>
    %c0_90 = arith.constant 0 : index
    %c256_91 = arith.constant 256 : index
    %87 = vector.load %arg15[%c0_90, %c256_91] : memref<3x512xf32, #tpu.memory_space<vmem>>, vector<3x128xf32>
    tpu.vector_store %arg15[%c0_90, %c256_91], %86 {strides = array<i32>} : memref<3x512xf32, #tpu.memory_space<vmem>>, vector<3x128xf32>,
    %c12_92 = arith.constant 12 : index
    %c0_93 = arith.constant 0 : index
    %88 = tpu.strided_load %arg14[%c12_92, %c0_93] {strides = array<i32: 2, 1>} : memref<20x128xf32, #tpu.memory_space<vmem>>, vector<3x128xf32>
    %c0_94 = arith.constant 0 : index
    %c384_95 = arith.constant 384 : index
    %89 = vector.load %arg15[%c0_94, %c384_95] : memref<3x512xf32, #tpu.memory_space<vmem>>, vector<3x128xf32>
    tpu.vector_store %arg15[%c0_94, %c384_95], %88 {strides = array<i32>} : memref<3x512xf32, #tpu.memory_space<vmem>>, vector<3x128xf32>,
    %c0_96 = arith.constant 0 : index
    %c0_97 = arith.constant 0 : index
    %90 = vector.load %arg15[%c0_96, %c0_97] : memref<3x512xf32, #tpu.memory_space<vmem>>, vector<3x512xf32>
    %91 = arith.truncf %90 : vector<3x512xf32> to vector<3x512xbf16>
    %c0_98 = arith.constant 0 : index
    %c0_99 = arith.constant 0 : index
    %92 = vector.load %arg4[%c0_98, %c0_99] : memref<512x64xbf16, #tpu.memory_space<vmem>>, vector<512x64xbf16>
    %cst_100 = arith.constant dense<0.000000e+00> : vector<3x64xf32>
    %93 = tpu.matmul %91, %92, %cst_100 {dimension_numbers = #tpu.dot_dimension_numbers<[1], [0], [0], [1], [0, 0, 1, 1], [], []>} : vector<3x512xbf16>, vector<512x64xbf16>, vector<3x64xf32> -> vector<3x64xf32>
    %c0_101 = arith.constant 0 : index
    %c0_102 = arith.constant 0 : index
    %94 = vector.load %arg8[%c0_101, %c0_102] : memref<1x64xf32, #tpu.memory_space<vmem>>, vector<1x64xf32>
    %95 = vector.broadcast %94 : vector<1x64xf32> to vector<3x64xf32>
    %96 = arith.addf %93, %95 : vector<3x64xf32>
    %cst_103 = arith.constant 0.000000e+00 : f32
    %97 = vector.broadcast %cst_103 : f32 to vector<3x64xf32>
    %98 = arith.maximumf %96, %97 : vector<3x64xf32>
    %cst_104 = arith.constant 0.000000e+00 : f32
    %99 = vector.broadcast %cst_104 : f32 to vector<4x128xf32>
    %c0_105 = arith.constant 0 : index
    %c0_106 = arith.constant 0 : index
    %100 = vector.load %arg16[%c0_105, %c0_106] : memref<11x128xf32, #tpu.memory_space<vmem>>, vector<4x128xf32>
    tpu.vector_store %arg16[%c0_105, %c0_106], %99 {strides = array<i32>} : memref<11x128xf32, #tpu.memory_space<vmem>>, vector<4x128xf32>,
    %cst_107 = arith.constant 0.000000e+00 : f32
    %101 = vector.broadcast %cst_107 : f32 to vector<5x128xf32>
    %c6_108 = arith.constant 6 : index
    %c0_109 = arith.constant 0 : index
    %102 = vector.load %arg16[%c6_108, %c0_109] : memref<11x128xf32, #tpu.memory_space<vmem>>, vector<5x128xf32>
    tpu.vector_store %arg16[%c6_108, %c0_109], %101 {strides = array<i32>} : memref<11x128xf32, #tpu.memory_space<vmem>>, vector<5x128xf32>,
    %c4_110 = arith.constant 4 : index
    %c0_111 = arith.constant 0 : index
    %103 = vector.load %arg16[%c4_110, %c0_111] : memref<11x128xf32, #tpu.memory_space<vmem>>, vector<3x64xf32>
    tpu.vector_store %arg16[%c4_110, %c0_111], %98 {strides = array<i32>} : memref<11x128xf32, #tpu.memory_space<vmem>>, vector<3x64xf32>,
    %c3_112 = arith.constant 3 : index
    %c64_113 = arith.constant 64 : index
    %104 = vector.load %arg16[%c3_112, %c64_113] : memref<11x128xf32, #tpu.memory_space<vmem>>, vector<3x64xf32>
    tpu.vector_store %arg16[%c3_112, %c64_113], %98 {strides = array<i32>} : memref<11x128xf32, #tpu.memory_space<vmem>>, vector<3x64xf32>,
    %c0_114 = arith.constant 0 : index
    %c0_115 = arith.constant 0 : index
    %105 = tpu.strided_load %arg16[%c0_114, %c0_115] {strides = array<i32: 2, 1>} : memref<11x128xf32, #tpu.memory_space<vmem>>, vector<2x128xf32>
    %c0_116 = arith.constant 0 : index
    %c0_117 = arith.constant 0 : index
    %106 = vector.load %arg17[%c0_116, %c0_117] : memref<2x512xf32, #tpu.memory_space<vmem>>, vector<2x128xf32>
    tpu.vector_store %arg17[%c0_116, %c0_117], %105 {strides = array<i32>} : memref<2x512xf32, #tpu.memory_space<vmem>>, vector<2x128xf32>,
    %c2_118 = arith.constant 2 : index
    %c0_119 = arith.constant 0 : index
    %107 = tpu.strided_load %arg16[%c2_118, %c0_119] {strides = array<i32: 2, 1>} : memref<11x128xf32, #tpu.memory_space<vmem>>, vector<2x128xf32>
    %c0_120 = arith.constant 0 : index
    %c128_121 = arith.constant 128 : index
    %108 = vector.load %arg17[%c0_120, %c128_121] : memref<2x512xf32, #tpu.memory_space<vmem>>, vector<2x128xf32>
    tpu.vector_store %arg17[%c0_120, %c128_121], %107 {strides = array<i32>} : memref<2x512xf32, #tpu.memory_space<vmem>>, vector<2x128xf32>,
    %c4_122 = arith.constant 4 : index
    %c0_123 = arith.constant 0 : index
    %109 = tpu.strided_load %arg16[%c4_122, %c0_123] {strides = array<i32: 2, 1>} : memref<11x128xf32, #tpu.memory_space<vmem>>, vector<2x128xf32>
    %c0_124 = arith.constant 0 : index
    %c256_125 = arith.constant 256 : index
    %110 = vector.load %arg17[%c0_124, %c256_125] : memref<2x512xf32, #tpu.memory_space<vmem>>, vector<2x128xf32>
    tpu.vector_store %arg17[%c0_124, %c256_125], %109 {strides = array<i32>} : memref<2x512xf32, #tpu.memory_space<vmem>>, vector<2x128xf32>,
    %c6_126 = arith.constant 6 : index
    %c0_127 = arith.constant 0 : index
    %111 = tpu.strided_load %arg16[%c6_126, %c0_127] {strides = array<i32: 2, 1>} : memref<11x128xf32, #tpu.memory_space<vmem>>, vector<2x128xf32>
    %c0_128 = arith.constant 0 : index
    %c384_129 = arith.constant 384 : index
    %112 = vector.load %arg17[%c0_128, %c384_129] : memref<2x512xf32, #tpu.memory_space<vmem>>, vector<2x128xf32>
    tpu.vector_store %arg17[%c0_128, %c384_129], %111 {strides = array<i32>} : memref<2x512xf32, #tpu.memory_space<vmem>>, vector<2x128xf32>,
    %c0_130 = arith.constant 0 : index
    %c0_131 = arith.constant 0 : index
    %113 = vector.load %arg17[%c0_130, %c0_131] : memref<2x512xf32, #tpu.memory_space<vmem>>, vector<2x512xf32>
    %114 = arith.truncf %113 : vector<2x512xf32> to vector<2x512xbf16>
    %c0_132 = arith.constant 0 : index
    %c0_133 = arith.constant 0 : index
    %115 = vector.load %arg5[%c0_132, %c0_133] : memref<512x128xbf16, #tpu.memory_space<vmem>>, vector<512x128xbf16>
    %cst_134 = arith.constant dense<0.000000e+00> : vector<2x128xf32>
    %116 = tpu.matmul %114, %115, %cst_134 {dimension_numbers = #tpu.dot_dimension_numbers<[1], [0], [0], [1], [0, 0, 1, 1], [], []>} : vector<2x512xbf16>, vector<512x128xbf16>, vector<2x128xf32> -> vector<2x128xf32>
    %c0_135 = arith.constant 0 : index
    %c0_136 = arith.constant 0 : index
    %117 = vector.load %arg9[%c0_135, %c0_136] : memref<1x128xf32, #tpu.memory_space<vmem>>, vector<1x128xf32>
    %118 = vector.broadcast %117 : vector<1x128xf32> to vector<2x128xf32>
    %119 = arith.addf %116, %118 : vector<2x128xf32>
    %cst_137 = arith.constant 0.000000e+00 : f32
    %120 = vector.broadcast %cst_137 : f32 to vector<2x128xf32>
    %121 = arith.maximumf %119, %120 : vector<2x128xf32>
    %c0_138 = arith.constant 0 : index
    %c0_139 = arith.constant 0 : index
    %c0_140 = arith.constant 0 : index
    %122 = vector.load %arg10[%c0_138, %c0_139, %c0_140] : memref<1x2x128xf32, #tpu.memory_space<vmem>>, vector<1x2x128xf32>
    %123 = vector.shape_cast %122 : vector<1x2x128xf32> to vector<2x128xf32>
    %124 = vector.shape_cast %121 : vector<2x128xf32> to vector<1x2x128xf32>
    tpu.vector_store %arg10[%c0_138, %c0_139, %c0_140], %124 {strides = array<i32>} : memref<1x2x128xf32, #tpu.memory_space<vmem>>, vector<1x2x128xf32>,
    return
  }
  func.func @transform_0(%arg0: i32) -> (i32, i32, i32) {
    %c0_i32 = arith.constant 0 : i32
    %c0_i32_0 = arith.constant 0 : i32
    %c0_i32_1 = arith.constant 0 : i32
    return %arg0, %c0_i32, %c0_i32_0 : i32, i32, i32
  }
  func.func @transform_1(%arg0: i32) -> (i32, i32) {
    %c0_i32 = arith.constant 0 : i32
    %c0_i32_0 = arith.constant 0 : i32
    %c0_i32_1 = arith.constant 0 : i32
    return %c0_i32, %c0_i32_0 : i32, i32
  }
  func.func @transform_2(%arg0: i32) -> (i32, i32) {
    %c0_i32 = arith.constant 0 : i32
    %c0_i32_0 = arith.constant 0 : i32
    %c0_i32_1 = arith.constant 0 : i32
    return %c0_i32, %c0_i32_0 : i32, i32
  }
  func.func @transform_3(%arg0: i32) -> (i32, i32) {
    %c0_i32 = arith.constant 0 : i32
    %c0_i32_0 = arith.constant 0 : i32
    %c0_i32_1 = arith.constant 0 : i32
    return %c0_i32, %c0_i32_0 : i32, i32
  }
  func.func @transform_4(%arg0: i32) -> (i32, i32) {
    %c0_i32 = arith.constant 0 : i32
    %c0_i32_0 = arith.constant 0 : i32
    %c0_i32_1 = arith.constant 0 : i32
    return %c0_i32, %c0_i32_0 : i32, i32
  }
  func.func @transform_5(%arg0: i32) -> (i32, i32) {
    %c0_i32 = arith.constant 0 : i32
    %c0_i32_0 = arith.constant 0 : i32
    %c0_i32_1 = arith.constant 0 : i32
    return %c0_i32, %c0_i32_0 : i32, i32
  }
  func.func @transform_6(%arg0: i32) -> (i32, i32) {
    %c0_i32 = arith.constant 0 : i32
    %c0_i32_0 = arith.constant 0 : i32
    %c0_i32_1 = arith.constant 0 : i32
    return %c0_i32, %c0_i32_0 : i32, i32
  }
  func.func @transform_7(%arg0: i32) -> (i32, i32) {
    %c0_i32 = arith.constant 0 : i32
    %c0_i32_0 = arith.constant 0 : i32
    %c0_i32_1 = arith.constant 0 : i32
    return %c0_i32, %c0_i32_0 : i32, i32
  }
  func.func @transform_8(%arg0: i32) -> (i32, i32) {
    %c0_i32 = arith.constant 0 : i32
    %c0_i32_0 = arith.constant 0 : i32
    %c0_i32_1 = arith.constant 0 : i32
    return %c0_i32, %c0_i32_0 : i32, i32
  }
  func.func @transform_9(%arg0: i32) -> (i32, i32, i32) {
    %c0_i32 = arith.constant 0 : i32
    %c0_i32_0 = arith.constant 0 : i32
    %c0_i32_1 = arith.constant 0 : i32
    return %arg0, %c0_i32, %c0_i32_0 : i32, i32, i32
  }
}

</mosaic_0001>

<llo_original>
// kernel: _lambda_.1
$region0: #{_lambda_.1}
  #allocation0 [shape = 'u32[]', space=smem, size = 0x4, offset = 0x4, fixed_abs, tag = 'smem constant byte address 0x4 - core index']
  #allocation1 [shape = 'u32[72,128]{1,0:T(1,128)}', space=vmem, size = 0x9000, scoped, tag = 'internal scratch']
  #allocation2 [shape = 'f32[64,128]{1,0:T(8,128)}', space=vmem, size = 0x8000, scoped, tag = 'scratch operand']
  #allocation3 [shape = 'f32[96,128]{1,0:T(8,128)}', space=vmem, size = 0xc000, scoped, tag = 'scratch operand']
  #allocation4 [shape = 'bf16[32,512]{1,0:T(8,128)(2,1)}', space=vmem, size = 0x8000, scoped, tag = 'scratch operand']
  #allocation5 [shape = 'f32[20,128]{1,0:T(8,128)}', space=vmem, size = 0x3000, scoped, tag = 'scratch operand']
  #allocation6 [shape = 'f32[3,512]{1,0:T(4,128)}', space=vmem, size = 0x2000, scoped, tag = 'scratch operand']
  #allocation7 [shape = 'f32[11,128]{1,0:T(8,128)}', space=vmem, size = 0x2000, scoped, tag = 'scratch operand']
  #allocation8 [shape = 'f32[2,512]{1,0:T(2,128)}', space=vmem, size = 0x1000, scoped, tag = 'scratch operand']
  %s0 = inlined_call_operand.vmem [shape: f32[2,71,16], index: 0, kind: input, shape index: {}]
  %s1 = inlined_call_operand.vmem [shape: bf16[128,128], index: 1, kind: input, shape index: {}]
  %s2 = inlined_call_operand.hbm [shape: bf16[512,32], index: 2, kind: input, shape index: {}]
  %s3 = inlined_call_operand.hbm [shape: bf16[512,64], index: 3, kind: input, shape index: {}]
  %s4 = inlined_call_operand.hbm [shape: bf16[512,128], index: 4, kind: input, shape index: {}]
  %s5 = inlined_call_operand.vmem [shape: f32[1,16], index: 5, kind: input, shape index: {}]
  %s6 = inlined_call_operand.vmem [shape: f32[1,32], index: 6, kind: input, shape index: {}]
  %s7 = inlined_call_operand.vmem [shape: f32[1,64], index: 7, kind: input, shape index: {}]
  %s8 = inlined_call_operand.vmem [shape: f32[1,128], index: 8, kind: input, shape index: {}]
  %s9 = inlined_call_operand.vmem [shape: f32[2,2,128], index: 9, kind: output, shape index: {}]
  %s10 = sld [smem:[#allocation0]]
  $region81: #{_lambda_.1} parent=0
    _
  %s12 = ssub.s32 1, %s10
  %s13 = scalar_select 0, %s12, %s10
  $region1: #{_lambda_.1} parent=0
    #allocation9 [shape = 'u8[131072]{0}', space=vmem, size = 0x20000, scoped, tag = 'input window, operand 2, single buffered']
    #allocation10 [shape = 's32[2]{0}', space=sflag, size = 0x8, scoped, tag = 'scoped memory for _lambda_.1']
    #allocation11 [shape = 'u8[131072]{0}', space=vmem, size = 0x20000, scoped, tag = 'input window, operand 3, single buffered']
    #allocation12 [shape = 's32[1]{0}', space=sflag, size = 0x4, scoped, tag = 'scoped memory for _lambda_.1']
    #allocation13 [shape = 'u8[131072]{0}', space=vmem, size = 0x20000, scoped, tag = 'input window, operand 4, single buffered']
    %14 = vsyncpa [#allocation10], 0
    %15 = vsyncpa [#allocation12], 0
    loop: start=0, step=1, limit=4
    $region2: #{_lambda_.1} parent=1 // loop_pre_header
      _
    $region3: #{_lambda_.1} parent=1 // loop_header
      %s17 = sphi 0, %s21
      %p18 = scmp.ge.s32.totalorder %s17, 4
      %s27 = sphi 0, %s29
      %s30 = sphi 0, %s27
      %s31 = sphi 0, %s30
      %s47 = sphi 0, %s31
      %s51 = sphi 0, %s51
      %s53 = sphi 0, %s51
      %s54 = sphi 0, %s53
      %s68 = sphi 0, %s54
      %s72 = sphi 0, %s72
      %s74 = sphi 0, %s72
      %s75 = sphi 0, %s74
      %s89 = sphi 0, %s75
      %s93 = sphi 0, %s93
      %s95 = sphi 0, %s93
      %s96 = sphi 0, %s95
      %s110 = sphi 0, %s96
      %s114 = sphi 0, %s114
      %s116 = sphi 0, %s114
      %s117 = sphi 0, %s116
      %s131 = sphi 0, %s117
      %s135 = sphi 0, %s135
      %s137 = sphi 0, %s135
      %s138 = sphi 0, %s137
      %s152 = sphi 0, %s138
      %s156 = sphi 0, %s156
      %s158 = sphi 0, %s156
      %s159 = sphi 0, %s158
      %s173 = sphi 0, %s159
      %s177 = sphi 0, %s177
      %s179 = sphi 0, %s177
      %s180 = sphi 0, %s179
      %s194 = sphi 0, %s180
      %s198 = sphi 0, %s198
      %s200 = sphi 0, %s198
      %s201 = sphi 0, %s200
      %s215 = sphi 0, %s201
      %s221 = sphi 0, %s223
      %s224 = sphi 0, %s221
      %s225 = sphi 0, %s224
      %s241 = sphi 0, %s225
    $region4: #{_lambda_.1} parent=1 // loop_header_branch
      %20 = sbr.rel (%p18) target = $region8
    $region5: #{_lambda_.1} parent=1 // loop_body
      %s22 = ssub.s32 %s17, 1
      %s23 = ssub.s32 %s17, 2
      %s24 = sadd.s32 %s17, 1
      %s25 = ssub.s32 %s17, %s24
      %p26 = scmp.eq.s32.totalorder %s25, 0
      %s28 = sadd.s32 %s27, 1
      %s29 = scalar_select %p26, %s27, %s28
      %p32 = pneg %p26
      %p33 = scmp.eq.s32.totalorder %s17, 1
      %p34 = por %p32, %p33
      %p35 = scmp.ne.s32.totalorder %s27, %s30
      %p36 = scmp.eq.s32.totalorder %s17, 0
      %p37 = por %p35, %p36
      %p38 = scmp.ne.s32.totalorder %s27, %s30
      %p39 = scmp.eq.s32.totalorder %s22, 1
      %p40 = por %p38, %p39
      %p41 = scmp.ne.s32.totalorder %s30, %s31
      %p42 = scmp.eq.s32.totalorder %s22, 0
      %p43 = por %p41, %p42
      %p44 = scmp.ne.s32.totalorder %s30, %s31
      %p45 = scmp.eq.s32.totalorder %s23, 1
      %p46 = por %p44, %p45
      %p48 = scmp.ne.s32.totalorder %s31, %s47
      %p49 = scmp.eq.s32.totalorder %s23, 0
      %p50 = por %p48, %p49
      %s52 = sadd.s32 %s51, 1
      %p55 = scmp.eq.s32.totalorder %s17, 1
      %p56 = scmp.ne.s32.totalorder %s51, %s53
      %p57 = scmp.eq.s32.totalorder %s17, 0
      %p58 = por %p56, %p57
      %p59 = scmp.ne.s32.totalorder %s51, %s53
      %p60 = scmp.eq.s32.totalorder %s22, 1
      %p61 = por %p59, %p60
      %p62 = scmp.ne.s32.totalorder %s53, %s54
      %p63 = scmp.eq.s32.totalorder %s22, 0
      %p64 = por %p62, %p63
      %p65 = scmp.ne.s32.totalorder %s53, %s54
      %p66 = scmp.eq.s32.totalorder %s23, 1
      %p67 = por %p65, %p66
      %p69 = scmp.ne.s32.totalorder %s54, %s68
      %p70 = scmp.eq.s32.totalorder %s23, 0
      %p71 = por %p69, %p70
      %s73 = sadd.s32 %s72, 1
      %p76 = scmp.eq.s32.totalorder %s17, 1
      %p77 = scmp.ne.s32.totalorder %s72, %s74
      %p78 = scmp.eq.s32.totalorder %s17, 0
      %p79 = por %p77, %p78
      %p80 = scmp.ne.s32.totalorder %s72, %s74
      %p81 = scmp.eq.s32.totalorder %s22, 1
      %p82 = por %p80, %p81
      %p83 = scmp.ne.s32.totalorder %s74, %s75
      %p84 = scmp.eq.s32.totalorder %s22, 0
      %p85 = por %p83, %p84
      %p86 = scmp.ne.s32.totalorder %s74, %s75
      %p87 = scmp.eq.s32.totalorder %s23, 1
      %p88 = por %p86, %p87
      %p90 = scmp.ne.s32.totalorder %s75, %s89
      %p91 = scmp.eq.s32.totalorder %s23, 0
      %p92 = por %p90, %p91
      %s94 = sadd.s32 %s93, 1
      %p97 = scmp.eq.s32.totalorder %s17, 1
      %p98 = scmp.ne.s32.totalorder %s93, %s95
      %p99 = scmp.eq.s32.totalorder %s17, 0
      %p100 = por %p98, %p99
      %p101 = scmp.ne.s32.totalorder %s93, %s95
      %p102 = scmp.eq.s32.totalorder %s22, 1
      %p103 = por %p101, %p102
      %p104 = scmp.ne.s32.totalorder %s95, %s96
      %p105 = scmp.eq.s32.totalorder %s22, 0
      %p106 = por %p104, %p105
      %p107 = scmp.ne.s32.totalorder %s95, %s96
      %p108 = scmp.eq.s32.totalorder %s23, 1
      %p109 = por %p107, %p108
      %p111 = scmp.ne.s32.totalorder %s96, %s110
      %p112 = scmp.eq.s32.totalorder %s23, 0
      %p113 = por %p111, %p112
      %s115 = sadd.s32 %s114, 1
      %p118 = scmp.eq.s32.totalorder %s17, 1
      %p119 = scmp.ne.s32.totalorder %s114, %s116
      %p120 = scmp.eq.s32.totalorder %s17, 0
      %p121 = por %p119, %p120
      %p122 = scmp.ne.s32.totalorder %s114, %s116
      %p123 = scmp.eq.s32.totalorder %s22, 1
      %p124 = por %p122, %p123
      %p125 = scmp.ne.s32.totalorder %s116, %s117
      %p126 = scmp.eq.s32.totalorder %s22, 0
      %p127 = por %p125, %p126
      %p128 = scmp.ne.s32.totalorder %s116, %s117
      %p129 = scmp.eq.s32.totalorder %s23, 1
      %p130 = por %p128, %p129
      %p132 = scmp.ne.s32.totalorder %s117, %s131
      %p133 = scmp.eq.s32.totalorder %s23, 0
      %p134 = por %p132, %p133
      %s136 = sadd.s32 %s135, 1
      %p139 = scmp.eq.s32.totalorder %s17, 1
      %p140 = scmp.ne.s32.totalorder %s135, %s137
      %p141 = scmp.eq.s32.totalorder %s17, 0
      %p142 = por %p140, %p141
      %p143 = scmp.ne.s32.totalorder %s135, %s137
      %p144 = scmp.eq.s32.totalorder %s22, 1
      %p145 = por %p143, %p144
      %p146 = scmp.ne.s32.totalorder %s137, %s138
      %p147 = scmp.eq.s32.totalorder %s22, 0
      %p148 = por %p146, %p147
      %p149 = scmp.ne.s32.totalorder %s137, %s138
      %p150 = scmp.eq.s32.totalorder %s23, 1
      %p151 = por %p149, %p150
      %p153 = scmp.ne.s32.totalorder %s138, %s152
      %p154 = scmp.eq.s32.totalorder %s23, 0
      %p155 = por %p153, %p154
      %s157 = sadd.s32 %s156, 1
      %p160 = scmp.eq.s32.totalorder %s17, 1
      %p161 = scmp.ne.s32.totalorder %s156, %s158
      %p162 = scmp.eq.s32.totalorder %s17, 0
      %p163 = por %p161, %p162
      %p164 = scmp.ne.s32.totalorder %s156, %s158
      %p165 = scmp.eq.s32.totalorder %s22, 1
      %p166 = por %p164, %p165
      %p167 = scmp.ne.s32.totalorder %s158, %s159
      %p168 = scmp.eq.s32.totalorder %s22, 0
      %p169 = por %p167, %p168
      %p170 = scmp.ne.s32.totalorder %s158, %s159
      %p171 = scmp.eq.s32.totalorder %s23, 1
      %p172 = por %p170, %p171
      %p174 = scmp.ne.s32.totalorder %s159, %s173
      %p175 = scmp.eq.s32.totalorder %s23, 0
      %p176 = por %p174, %p175
      %s178 = sadd.s32 %s177, 1
      %p181 = scmp.eq.s32.totalorder %s17, 1
      %p182 = scmp.ne.s32.totalorder %s177, %s179
      %p183 = scmp.eq.s32.totalorder %s17, 0
      %p184 = por %p182, %p183
      %p185 = scmp.ne.s32.totalorder %s177, %s179
      %p186 = scmp.eq.s32.totalorder %s22, 1
      %p187 = por %p185, %p186
      %p188 = scmp.ne.s32.totalorder %s179, %s180
      %p189 = scmp.eq.s32.totalorder %s22, 0
      %p190 = por %p188, %p189
      %p191 = scmp.ne.s32.totalorder %s179, %s180
      %p192 = scmp.eq.s32.totalorder %s23, 1
      %p193 = por %p191, %p192
      %p195 = scmp.ne.s32.totalorder %s180, %s194
      %p196 = scmp.eq.s32.totalorder %s23, 0
      %p197 = por %p195, %p196
      %s199 = sadd.s32 %s198, 1
      %p202 = scmp.eq.s32.totalorder %s17, 1
      %p203 = scmp.ne.s32.totalorder %s198, %s200
      %p204 = scmp.eq.s32.totalorder %s17, 0
      %p205 = por %p203, %p204
      %p206 = scmp.ne.s32.totalorder %s198, %s200
      %p207 = scmp.eq.s32.totalorder %s22, 1
      %p208 = por %p206, %p207
      %p209 = scmp.ne.s32.totalorder %s200, %s201
      %p210 = scmp.eq.s32.totalorder %s22, 0
      %p211 = por %p209, %p210
      %p212 = scmp.ne.s32.totalorder %s200, %s201
      %p213 = scmp.eq.s32.totalorder %s23, 1
      %p214 = por %p212, %p213
      %p216 = scmp.ne.s32.totalorder %s201, %s215
      %p217 = scmp.eq.s32.totalorder %s23, 0
      %p218 = por %p216, %p217
      %s219 = ssub.s32 %s17, %s24
      %p220 = scmp.eq.s32.totalorder %s219, 0
      %s222 = sadd.s32 %s221, 1
      %s223 = scalar_select %p220, %s221, %s222
      %p226 = pneg %p220
      %p227 = scmp.eq.s32.totalorder %s17, 1
      %p228 = por %p226, %p227
      %p229 = scmp.ne.s32.totalorder %s221, %s224
      %p230 = scmp.eq.s32.totalorder %s17, 0
      %p231 = por %p229, %p230
      %p232 = scmp.ne.s32.totalorder %s221, %s224
      %p233 = scmp.eq.s32.totalorder %s22, 1
      %p234 = por %p232, %p233
      %p235 = scmp.ne.s32.totalorder %s224, %s225
      %p236 = scmp.eq.s32.totalorder %s22, 0
      %p237 = por %p235, %p236
      %p238 = scmp.ne.s32.totalorder %s224, %s225
      %p239 = scmp.eq.s32.totalorder %s23, 1
      %p240 = por %p238, %p239
      %p242 = scmp.ne.s32.totalorder %s225, %s241
      %p243 = scmp.eq.s32.totalorder %s23, 0
      %p244 = por %p242, %p243
      %p245 = scmp.le.s32.totalorder 1, %s17
      %p246 = scmp.lt.s32.totalorder %s17, 3
      %p247 = pnand %p245, %p246
      %p248 = pneg %p247
      // Predicated region
      $region9: #{_lambda_.1} parent=5 // pred_check
        _
      $region10: #{_lambda_.1} parent=5 // pred_check_branch
        %250 = sbr.rel (%p247) target = $region12
      $region11: #{_lambda_.1} parent=5 // pred_region
        %s251 = ssub.s32 %s17, 1
        // Predicated region
        $region13: #{_lambda_.1} parent=11 // pred_check
          %p252 = pneg %p64
        $region14: #{_lambda_.1} parent=11 // pred_check_branch
          %254 = sbr.rel (%p252) target = $region16
        $region15: #{_lambda_.1} parent=11 // pred_region
          _
        $region16: #{_lambda_.1} parent=11 // pred_fallthru
          _
        // Predicated region
        $region17: #{_lambda_.1} parent=11 // pred_check
          %p255 = pneg %p85
        $region18: #{_lambda_.1} parent=11 // pred_check_branch
          %257 = sbr.rel (%p255) target = $region20
        $region19: #{_lambda_.1} parent=11 // pred_region
          %259 = vsyncadd [#allocation10], 0
          %s260 = sshll.u32 %s2, 4
          %s261 = int_to_ptr.hbm [resolvable:$true] %s260
          %s262 = sshll.u32 [#allocation9], 4
          %s263 = int_to_ptr.vmem [resolvable:$true] %s262
          %268 = dma.hbm_to_vmem [thread:$0]  %s261, 4096, %s263, [#allocation10], 64, 64, 4
        $region20: #{_lambda_.1} parent=11 // pred_fallthru
          _
        // Predicated region
        $region21: #{_lambda_.1} parent=11 // pred_check
          %p269 = pneg %p106
        $region22: #{_lambda_.1} parent=11 // pred_check_branch
          %271 = sbr.rel (%p269) target = $region24
        $region23: #{_lambda_.1} parent=11 // pred_region
          %273 = vsyncadd [#allocation12], 0
          %s274 = sshll.u32 %s3, 4
          %s275 = int_to_ptr.hbm [resolvable:$true] %s274
          %s276 = sshll.u32 [#allocation11], 4
          %s277 = int_to_ptr.vmem [resolvable:$true] %s276
          %282 = dma.hbm_to_vmem [thread:$0]  %s275, 4096, %s277, [#allocation12], 64, 64, 4
        $region24: #{_lambda_.1} parent=11 // pred_fallthru
          _
        // Predicated region
        $region25: #{_lambda_.1} parent=11 // pred_check
          %p283 = pneg %p127
        $region26: #{_lambda_.1} parent=11 // pred_check_branch
          %285 = sbr.rel (%p283) target = $region28
        $region27: #{_lambda_.1} parent=11 // pred_region
          %287 = vsyncadd [#allocation12], 0
          %s288 = sshll.u32 %s4, 4
          %s289 = int_to_ptr.hbm [resolvable:$true] %s288
          %s290 = sshll.u32 [#allocation13], 4
          %s291 = int_to_ptr.vmem [resolvable:$true] %s290
          %296 = dma.hbm_to_vmem [thread:$0]  %s289, 4096, %s291, [#allocation12], 64, 64, 4
        $region28: #{_lambda_.1} parent=11 // pred_fallthru
          _
        // Predicated region
        $region29: #{_lambda_.1} parent=11 // pred_check
          %p297 = pneg %p148
        $region30: #{_lambda_.1} parent=11 // pred_check_branch
          %299 = sbr.rel (%p297) target = $region32
        $region31: #{_lambda_.1} parent=11 // pred_region
          _
        $region32: #{_lambda_.1} parent=11 // pred_fallthru
          _
        // Predicated region
        $region33: #{_lambda_.1} parent=11 // pred_check
          %p300 = pneg %p169
        $region34: #{_lambda_.1} parent=11 // pred_check_branch
          %302 = sbr.rel (%p300) target = $region36
        $region35: #{_lambda_.1} parent=11 // pred_region
          _
        $region36: #{_lambda_.1} parent=11 // pred_fallthru
          _
        // Predicated region
        $region37: #{_lambda_.1} parent=11 // pred_check
          %p303 = pneg %p190
        $region38: #{_lambda_.1} parent=11 // pred_check_branch
          %305 = sbr.rel (%p303) target = $region40
        $region39: #{_lambda_.1} parent=11 // pred_region
          _
        $region40: #{_lambda_.1} parent=11 // pred_fallthru
          _
        // Predicated region
        $region41: #{_lambda_.1} parent=11 // pred_check
          %p306 = pneg %p211
        $region42: #{_lambda_.1} parent=11 // pred_check_branch
          %308 = sbr.rel (%p306) target = $region44
        $region43: #{_lambda_.1} parent=11 // pred_region
          _
        $region44: #{_lambda_.1} parent=11 // pred_fallthru
          _
      $region12: #{_lambda_.1} parent=5 // pred_fallthru
        _
      %p309 = scmp.lt.s32.totalorder %s17, 2
      // Predicated region
      $region45: #{_lambda_.1} parent=5 // pred_check
        %p310 = pneg %p309
      $region46: #{_lambda_.1} parent=5 // pred_check_branch
        %312 = sbr.rel (%p310) target = $region48
      $region47: #{_lambda_.1} parent=5 // pred_region
        // Predicated region
        $region49: #{_lambda_.1} parent=47 // pred_check
          %p313 = pneg %p37
        $region50: #{_lambda_.1} parent=47 // pred_check_branch
          %315 = sbr.rel (%p313) target = $region52
        $region51: #{_lambda_.1} parent=47 // pred_region
          %p316 = scmp.lt.s32.totalorder %s17, 1
          %s317 = scalar_select %p316, %s17, 1
          %s318 = smul.addr %s317, 9
          %s319 = smul.addr %s318, 8
          %s320 = scalar_lea.vmem %s0, %s319
        $region52: #{_lambda_.1} parent=47 // pred_fallthru
          _
      $region48: #{_lambda_.1} parent=5 // pred_fallthru
        _
      %p321 = scmp.le.s32.totalorder 1, %s17
      %p322 = scmp.lt.s32.totalorder %s17, 3
      %p323 = pnand %p321, %p322
      %p324 = pneg %p323
      // Predicated region
      $region53: #{_lambda_.1} parent=5 // pred_check
        _
      $region54: #{_lambda_.1} parent=5 // pred_check_branch
        %326 = sbr.rel (%p323) target = $region56
      $region55: #{_lambda_.1} parent=5 // pred_region
        %s327 = ssub.s32 %s17, 1
        // Predicated region
        $region57: #{_lambda_.1} parent=55 // pred_check
          %p328 = pneg %p85
        $region58: #{_lambda_.1} parent=55 // pred_check_branch
          %330 = sbr.rel (%p328) target = $region60
        $region59: #{_lambda_.1} parent=55 // pred_region
          %332 = dma.done [#allocation10], 4096
        $region60: #{_lambda_.1} parent=55 // pred_fallthru
          _
        // Predicated region
        $region61: #{_lambda_.1} parent=55 // pred_check
          %p333 = pneg %p106
        $region62: #{_lambda_.1} parent=55 // pred_check_branch
          %335 = sbr.rel (%p333) target = $region64
        $region63: #{_lambda_.1} parent=55 // pred_region
          %337 = dma.done [#allocation12], 4096
        $region64: #{_lambda_.1} parent=55 // pred_fallthru
          _
        // Predicated region
        $region65: #{_lambda_.1} parent=55 // pred_check
          %p338 = pneg %p127
        $region66: #{_lambda_.1} parent=55 // pred_check_branch
          %340 = sbr.rel (%p338) target = $region68
        $region67: #{_lambda_.1} parent=55 // pred_region
          %342 = dma.done [#allocation12], 4096
        $region68: #{_lambda_.1} parent=55 // pred_fallthru
          _
        %p343 = scmp.lt.s32.totalorder %s22, 1
        %s344 = scalar_select %p343, %s22, 1
        %s345 = smul.addr %s344, 9
        %s346 = smul.addr %s345, 8
        %s347 = scalar_lea.vmem %s0, %s346
        %p348 = pneg %p43
        %p349 = pneg %p40
        %p350 = pneg %p64
        %p351 = pneg %p61
        %p352 = pneg %p85
        %p353 = pneg %p82
        %p354 = pneg %p106
        %p355 = pneg %p103
        %p356 = pneg %p127
        %p357 = pneg %p124
        %p358 = pneg %p148
        %p359 = pneg %p145
        %p360 = pneg %p169
        %p361 = pneg %p166
        %p362 = pneg %p190
        %p363 = pneg %p187
        %p364 = pneg %p211
        %p365 = pneg %p208
        %p366 = pneg %p237
        %p367 = pneg %p234
        %p368 = scmp.lt.s32.totalorder %s22, 1
        %s369 = scalar_select %p368, %s22, 1
        %s370 = smul.addr %s369, 2
        %s371 = scalar_lea.vmem %s9, %s370
        %p372 = scmp.lt.s32.totalorder %s22, 1
        %s373 = scalar_select %p372, %s22, 1
        %s374 = smul.addr %s373, 9
        %s375 = smul.addr %s374, 8
        %s376 = scalar_lea.vmem %s0, %s375
        %p377 = scmp.lt.s32.totalorder %s22, 1
        %s378 = scalar_select %p377, %s22, 1
        %s379 = smul.addr %s378, 2
        %s380 = scalar_lea.vmem %s9, %s379
        %v381 = vld [vmem:[%s376] sm:$0xff]
        %v382 = vld [vmem:[%s376 + $0x8] sm:$0xff]
        %v383 = vld [vmem:[%s376 + $0x10] sm:$0xff]
        %v384 = vld [vmem:[%s376 + $0x18] sm:$0xff]
        %v385 = vld [vmem:[%s376 + $0x20] sm:$0xff]
        %v386 = vld [vmem:[%s376 + $0x28] sm:$0xff]
        %v387 = vld [vmem:[%s376 + $0x30] sm:$0xff]
        %v388 = vld [vmem:[%s376 + $0x38] sm:$0xff]
        %vm389 = vcmask 130048
        %390 = vst.msk [vmem:[#allocation2] sm:$0xff] %vm389, %v381
        %391 = vst.msk [vmem:[#allocation2 + $0x8] sm:$0xff] %vm389, %v382
        %392 = vst.msk [vmem:[#allocation2 + $0x10] sm:$0xff] %vm389, %v383
        %393 = vst.msk [vmem:[#allocation2 + $0x18] sm:$0xff] %vm389, %v384
        %394 = vst.msk [vmem:[#allocation2 + $0x20] sm:$0xff] %vm389, %v385
        %395 = vst.msk [vmem:[#allocation2 + $0x28] sm:$0xff] %vm389, %v386
        %396 = vst.msk [vmem:[#allocation2 + $0x30] sm:$0xff] %vm389, %v387
        %397 = vst.msk [vmem:[#allocation2 + $0x38] sm:$0xff] %vm389, %v388
        %v398 = vld [vmem:[%s376 + $0x1] sm:$0xff]
        %v399 = vld [vmem:[%s376 + $0x9] sm:$0xff]
        %v400 = vld [vmem:[%s376 + $0x11] sm:$0xff]
        %v401 = vld [vmem:[%s376 + $0x19] sm:$0xff]
        %v402 = vld [vmem:[%s376 + $0x21] sm:$0xff]
        %v403 = vld [vmem:[%s376 + $0x29] sm:$0xff]
        %v404 = vld [vmem:[%s376 + $0x31] sm:$0xff]
        %v405 = vld [vmem:[%s376 + $0x39] sm:$0xff]
        %414 = vrot.lane.b32.xlu0 %v398, 16
        %v415 = vpop.permute.xlu0 %414
        %416 = vrot.lane.b32.xlu0 %v399, 16
        %v417 = vpop.permute.xlu0 %416
        %418 = vrot.lane.b32.xlu0 %v400, 16
        %v419 = vpop.permute.xlu0 %418
        %420 = vrot.lane.b32.xlu0 %v401, 16
        %v421 = vpop.permute.xlu0 %420
        %422 = vrot.lane.b32.xlu0 %v402, 16
        %v423 = vpop.permute.xlu0 %422
        %424 = vrot.lane.b32.xlu0 %v403, 16
        %v425 = vpop.permute.xlu0 %424
        %426 = vrot.lane.b32.xlu0 %v404, 16
        %v427 = vpop.permute.xlu0 %426
        %428 = vrot.lane.b32.xlu0 %v405, 16
        %v429 = vpop.permute.xlu0 %428
        %vm438 = vcmask 261248
        %439 = vst.msk [vmem:[#allocation2] sm:$0xff] %vm438, %v415
        %440 = vst.msk [vmem:[#allocation2 + $0x8] sm:$0xff] %vm438, %v417
        %441 = vst.msk [vmem:[#allocation2 + $0x10] sm:$0xff] %vm438, %v419
        %442 = vst.msk [vmem:[#allocation2 + $0x18] sm:$0xff] %vm438, %v421
        %443 = vst.msk [vmem:[#allocation2 + $0x20] sm:$0xff] %vm438, %v423
        %444 = vst.msk [vmem:[#allocation2 + $0x28] sm:$0xff] %vm438, %v425
        %445 = vst.msk [vmem:[#allocation2 + $0x30] sm:$0xff] %vm438, %v427
        %446 = vst.msk [vmem:[#allocation2 + $0x38] sm:$0xff] %vm438, %v429
        %v447 = vld [vmem:[%s376 + $0x2] sm:$0xff]
        %v448 = vld [vmem:[%s376 + $0xa] sm:$0xff]
        %v449 = vld [vmem:[%s376 + $0x12] sm:$0xff]
        %v450 = vld [vmem:[%s376 + $0x1a] sm:$0xff]
        %v451 = vld [vmem:[%s376 + $0x22] sm:$0xff]
        %v452 = vld [vmem:[%s376 + $0x2a] sm:$0xff]
        %v453 = vld [vmem:[%s376 + $0x32] sm:$0xff]
        %v454 = vld [vmem:[%s376 + $0x3a] sm:$0xff]
        %463 = vrot.lane.b32.xlu0 %v447, 32
        %v464 = vpop.permute.xlu0 %463
        %465 = vrot.lane.b32.xlu0 %v448, 32
        %v466 = vpop.permute.xlu0 %465
        %467 = vrot.lane.b32.xlu0 %v449, 32
        %v468 = vpop.permute.xlu0 %467
        %469 = vrot.lane.b32.xlu0 %v450, 32
        %v470 = vpop.permute.xlu0 %469
        %471 = vrot.lane.b32.xlu0 %v451, 32
        %v472 = vpop.permute.xlu0 %471
        %473 = vrot.lane.b32.xlu0 %v452, 32
        %v474 = vpop.permute.xlu0 %473
        %475 = vrot.lane.b32.xlu0 %v453, 32
        %v476 = vpop.permute.xlu0 %475
        %477 = vrot.lane.b32.xlu0 %v454, 32
        %v478 = vpop.permute.xlu0 %477
        %vm487 = vcmask 392448
        %488 = vst.msk [vmem:[#allocation2] sm:$0xff] %vm487, %v464
        %489 = vst.msk [vmem:[#allocation2 + $0x8] sm:$0xff] %vm487, %v466
        %490 = vst.msk [vmem:[#allocation2 + $0x10] sm:$0xff] %vm487, %v468
        %491 = vst.msk [vmem:[#allocation2 + $0x18] sm:$0xff] %vm487, %v470
        %492 = vst.msk [vmem:[#allocation2 + $0x20] sm:$0xff] %vm487, %v472
        %493 = vst.msk [vmem:[#allocation2 + $0x28] sm:$0xff] %vm487, %v474
        %494 = vst.msk [vmem:[#allocation2 + $0x30] sm:$0xff] %vm487, %v476
        %495 = vst.msk [vmem:[#allocation2 + $0x38] sm:$0xff] %vm487, %v478
        %v496 = vld [vmem:[%s376 + $0x3] sm:$0xff]
        %v497 = vld [vmem:[%s376 + $0xb] sm:$0xff]
        %v498 = vld [vmem:[%s376 + $0x13] sm:$0xff]
        %v499 = vld [vmem:[%s376 + $0x1b] sm:$0xff]
        %v500 = vld [vmem:[%s376 + $0x23] sm:$0xff]
        %v501 = vld [vmem:[%s376 + $0x2b] sm:$0xff]
        %v502 = vld [vmem:[%s376 + $0x33] sm:$0xff]
        %v503 = vld [vmem:[%s376 + $0x3b] sm:$0xff]
        %512 = vrot.lane.b32.xlu0 %v496, 48
        %v513 = vpop.permute.xlu0 %512
        %514 = vrot.lane.b32.xlu0 %v497, 48
        %v515 = vpop.permute.xlu0 %514
        %516 = vrot.lane.b32.xlu0 %v498, 48
        %v517 = vpop.permute.xlu0 %516
        %518 = vrot.lane.b32.xlu0 %v499, 48
        %v519 = vpop.permute.xlu0 %518
        %520 = vrot.lane.b32.xlu0 %v500, 48
        %v521 = vpop.permute.xlu0 %520
        %522 = vrot.lane.b32.xlu0 %v501, 48
        %v523 = vpop.permute.xlu0 %522
        %524 = vrot.lane.b32.xlu0 %v502, 48
        %v525 = vpop.permute.xlu0 %524
        %526 = vrot.lane.b32.xlu0 %v503, 48
        %v527 = vpop.permute.xlu0 %526
        %vm536 = vcmask 523648
        %537 = vst.msk [vmem:[#allocation2] sm:$0xff] %vm536, %v513
        %538 = vst.msk [vmem:[#allocation2 + $0x8] sm:$0xff] %vm536, %v515
        %539 = vst.msk [vmem:[#allocation2 + $0x10] sm:$0xff] %vm536, %v517
        %540 = vst.msk [vmem:[#allocation2 + $0x18] sm:$0xff] %vm536, %v519
        %541 = vst.msk [vmem:[#allocation2 + $0x20] sm:$0xff] %vm536, %v521
        %542 = vst.msk [vmem:[#allocation2 + $0x28] sm:$0xff] %vm536, %v523
        %543 = vst.msk [vmem:[#allocation2 + $0x30] sm:$0xff] %vm536, %v525
        %544 = vst.msk [vmem:[#allocation2 + $0x38] sm:$0xff] %vm536, %v527
        %v545 = vld [vmem:[%s376 + $0x4] sm:$0xff]
        %v546 = vld [vmem:[%s376 + $0xc] sm:$0xff]
        %v547 = vld [vmem:[%s376 + $0x14] sm:$0xff]
        %v548 = vld [vmem:[%s376 + $0x1c] sm:$0xff]
        %v549 = vld [vmem:[%s376 + $0x24] sm:$0xff]
        %v550 = vld [vmem:[%s376 + $0x2c] sm:$0xff]
        %v551 = vld [vmem:[%s376 + $0x34] sm:$0xff]
        %v552 = vld [vmem:[%s376 + $0x3c] sm:$0xff]
        %561 = vrot.lane.b32.xlu0 %v545, 64
        %v562 = vpop.permute.xlu0 %561
        %563 = vrot.lane.b32.xlu0 %v546, 64
        %v564 = vpop.permute.xlu0 %563
        %565 = vrot.lane.b32.xlu0 %v547, 64
        %v566 = vpop.permute.xlu0 %565
        %567 = vrot.lane.b32.xlu0 %v548, 64
        %v568 = vpop.permute.xlu0 %567
        %569 = vrot.lane.b32.xlu0 %v549, 64
        %v570 = vpop.permute.xlu0 %569
        %571 = vrot.lane.b32.xlu0 %v550, 64
        %v572 = vpop.permute.xlu0 %571
        %573 = vrot.lane.b32.xlu0 %v551, 64
        %v574 = vpop.permute.xlu0 %573
        %575 = vrot.lane.b32.xlu0 %v552, 64
        %v576 = vpop.permute.xlu0 %575
        %vm585 = vcmask 654848
        %586 = vst.msk [vmem:[#allocation2] sm:$0xff] %vm585, %v562
        %587 = vst.msk [vmem:[#allocation2 + $0x8] sm:$0xff] %vm585, %v564
        %588 = vst.msk [vmem:[#allocation2 + $0x10] sm:$0xff] %vm585, %v566
        %589 = vst.msk [vmem:[#allocation2 + $0x18] sm:$0xff] %vm585, %v568
        %590 = vst.msk [vmem:[#allocation2 + $0x20] sm:$0xff] %vm585, %v570
        %591 = vst.msk [vmem:[#allocation2 + $0x28] sm:$0xff] %vm585, %v572
        %592 = vst.msk [vmem:[#allocation2 + $0x30] sm:$0xff] %vm585, %v574
        %593 = vst.msk [vmem:[#allocation2 + $0x38] sm:$0xff] %vm585, %v576
        %v594 = vld [vmem:[%s376 + $0x5] sm:$0xff]
        %v595 = vld [vmem:[%s376 + $0xd] sm:$0xff]
        %v596 = vld [vmem:[%s376 + $0x15] sm:$0xff]
        %v597 = vld [vmem:[%s376 + $0x1d] sm:$0xff]
        %v598 = vld [vmem:[%s376 + $0x25] sm:$0xff]
        %v599 = vld [vmem:[%s376 + $0x2d] sm:$0xff]
        %v600 = vld [vmem:[%s376 + $0x35] sm:$0xff]
        %v601 = vld [vmem:[%s376 + $0x3d] sm:$0xff]
        %610 = vrot.lane.b32.xlu0 %v594, 80
        %v611 = vpop.permute.xlu0 %610
        %612 = vrot.lane.b32.xlu0 %v595, 80
        %v613 = vpop.permute.xlu0 %612
        %614 = vrot.lane.b32.xlu0 %v596, 80
        %v615 = vpop.permute.xlu0 %614
        %616 = vrot.lane.b32.xlu0 %v597, 80
        %v617 = vpop.permute.xlu0 %616
        %618 = vrot.lane.b32.xlu0 %v598, 80
        %v619 = vpop.permute.xlu0 %618
        %620 = vrot.lane.b32.xlu0 %v599, 80
        %v621 = vpop.permute.xlu0 %620
        %622 = vrot.lane.b32.xlu0 %v600, 80
        %v623 = vpop.permute.xlu0 %622
        %624 = vrot.lane.b32.xlu0 %v601, 80
        %v625 = vpop.permute.xlu0 %624
        %vm634 = vcmask 786048
        %635 = vst.msk [vmem:[#allocation2] sm:$0xff] %vm634, %v611
        %636 = vst.msk [vmem:[#allocation2 + $0x8] sm:$0xff] %vm634, %v613
        %637 = vst.msk [vmem:[#allocation2 + $0x10] sm:$0xff] %vm634, %v615
        %638 = vst.msk [vmem:[#allocation2 + $0x18] sm:$0xff] %vm634, %v617
        %639 = vst.msk [vmem:[#allocation2 + $0x20] sm:$0xff] %vm634, %v619
        %640 = vst.msk [vmem:[#allocation2 + $0x28] sm:$0xff] %vm634, %v621
        %641 = vst.msk [vmem:[#allocation2 + $0x30] sm:$0xff] %vm634, %v623
        %642 = vst.msk [vmem:[#allocation2 + $0x38] sm:$0xff] %vm634, %v625
        %v643 = vld [vmem:[%s376 + $0x6] sm:$0xff]
        %v644 = vld [vmem:[%s376 + $0xe] sm:$0xff]
        %v645 = vld [vmem:[%s376 + $0x16] sm:$0xff]
        %v646 = vld [vmem:[%s376 + $0x1e] sm:$0xff]
        %v647 = vld [vmem:[%s376 + $0x26] sm:$0xff]
        %v648 = vld [vmem:[%s376 + $0x2e] sm:$0xff]
        %v649 = vld [vmem:[%s376 + $0x36] sm:$0xff]
        %v650 = vld [vmem:[%s376 + $0x3e] sm:$0xff]
        %659 = vrot.lane.b32.xlu0 %v643, 96
        %v660 = vpop.permute.xlu0 %659
        %661 = vrot.lane.b32.xlu0 %v644, 96
        %v662 = vpop.permute.xlu0 %661
        %663 = vrot.lane.b32.xlu0 %v645, 96
        %v664 = vpop.permute.xlu0 %663
        %665 = vrot.lane.b32.xlu0 %v646, 96
        %v666 = vpop.permute.xlu0 %665
        %667 = vrot.lane.b32.xlu0 %v647, 96
        %v668 = vpop.permute.xlu0 %667
        %669 = vrot.lane.b32.xlu0 %v648, 96
        %v670 = vpop.permute.xlu0 %669
        %671 = vrot.lane.b32.xlu0 %v649, 96
        %v672 = vpop.permute.xlu0 %671
        %673 = vrot.lane.b32.xlu0 %v650, 96
        %v674 = vpop.permute.xlu0 %673
        %vm683 = vcmask 917248
        %684 = vst.msk [vmem:[#allocation2] sm:$0xff] %vm683, %v660
        %685 = vst.msk [vmem:[#allocation2 + $0x8] sm:$0xff] %vm683, %v662
        %686 = vst.msk [vmem:[#allocation2 + $0x10] sm:$0xff] %vm683, %v664
        %687 = vst.msk [vmem:[#allocation2 + $0x18] sm:$0xff] %vm683, %v666
        %688 = vst.msk [vmem:[#allocation2 + $0x20] sm:$0xff] %vm683, %v668
        %689 = vst.msk [vmem:[#allocation2 + $0x28] sm:$0xff] %vm683, %v670
        %690 = vst.msk [vmem:[#allocation2 + $0x30] sm:$0xff] %vm683, %v672
        %691 = vst.msk [vmem:[#allocation2 + $0x38] sm:$0xff] %vm683, %v674
        %v692 = vld [vmem:[%s376 + $0x7] sm:$0xff]
        %v693 = vld [vmem:[%s376 + $0xf] sm:$0xff]
        %v694 = vld [vmem:[%s376 + $0x17] sm:$0xff]
        %v695 = vld [vmem:[%s376 + $0x1f] sm:$0xff]
        %v696 = vld [vmem:[%s376 + $0x27] sm:$0xff]
        %v697 = vld [vmem:[%s376 + $0x2f] sm:$0xff]
        %v698 = vld [vmem:[%s376 + $0x37] sm:$0xff]
        %v699 = vld [vmem:[%s376 + $0x3f] sm:$0xff]
        %708 = vrot.lane.b32.xlu0 %v692, 112
        %v709 = vpop.permute.xlu0 %708
        %710 = vrot.lane.b32.xlu0 %v693, 112
        %v711 = vpop.permute.xlu0 %710
        %712 = vrot.lane.b32.xlu0 %v694, 112
        %v713 = vpop.permute.xlu0 %712
        %714 = vrot.lane.b32.xlu0 %v695, 112
        %v715 = vpop.permute.xlu0 %714
        %716 = vrot.lane.b32.xlu0 %v696, 112
        %v717 = vpop.permute.xlu0 %716
        %718 = vrot.lane.b32.xlu0 %v697, 112
        %v719 = vpop.permute.xlu0 %718
        %720 = vrot.lane.b32.xlu0 %v698, 112
        %v721 = vpop.permute.xlu0 %720
        %722 = vrot.lane.b32.xlu0 %v699, 112
        %v723 = vpop.permute.xlu0 %722
        %vm732 = vcmask 1048448
        %733 = vst.msk [vmem:[#allocation2] sm:$0xff] %vm732, %v709
        %734 = vst.msk [vmem:[#allocation2 + $0x8] sm:$0xff] %vm732, %v711
        %735 = vst.msk [vmem:[#allocation2 + $0x10] sm:$0xff] %vm732, %v713
        %736 = vst.msk [vmem:[#allocation2 + $0x18] sm:$0xff] %vm732, %v715
        %737 = vst.msk [vmem:[#allocation2 + $0x20] sm:$0xff] %vm732, %v717
        %738 = vst.msk [vmem:[#allocation2 + $0x28] sm:$0xff] %vm732, %v719
        %739 = vst.msk [vmem:[#allocation2 + $0x30] sm:$0xff] %vm732, %v721
        %740 = vst.msk [vmem:[#allocation2 + $0x38] sm:$0xff] %vm732, %v723
        %v741 = vld [vmem:[#allocation2] sm:$0xff]
        %v742 = vld [vmem:[#allocation2 + $0x8] sm:$0xff]
        %v743 = vld [vmem:[#allocation2 + $0x10] sm:$0xff]
        %v744 = vld [vmem:[#allocation2 + $0x18] sm:$0xff]
        %v745 = vld [vmem:[#allocation2 + $0x20] sm:$0xff]
        %v746 = vld [vmem:[#allocation2 + $0x28] sm:$0xff]
        %v747 = vld [vmem:[#allocation2 + $0x30] sm:$0xff]
        %v748 = vld [vmem:[#allocation2 + $0x38] sm:$0xff]
        %v749 = vpack.c.bf16 %v742, %v741
        %v750 = vpack.c.bf16 %v744, %v743
        %v751 = vpack.c.bf16 %v746, %v745
        %v752 = vpack.c.bf16 %v748, %v747
        %v753 = vld [vmem:[%s1] sm:$0xf]
        %v754 = vld [vmem:[%s1 + $0x4] sm:$0xf]
        %v755 = vld [vmem:[%s1 + $0x8] sm:$0xf]
        %v756 = vld [vmem:[%s1 + $0xc] sm:$0xf]
        %v757 = vld [vmem:[%s1 + $0x10] sm:$0xf]
        %v758 = vld [vmem:[%s1 + $0x14] sm:$0xf]
        %v759 = vld [vmem:[%s1 + $0x18] sm:$0xf]
        %v760 = vld [vmem:[%s1 + $0x1c] sm:$0xf]
        %v761 = vld [vmem:[%s1 + $0x20] sm:$0xf]
        %v762 = vld [vmem:[%s1 + $0x24] sm:$0xf]
        %v763 = vld [vmem:[%s1 + $0x28] sm:$0xf]
        %v764 = vld [vmem:[%s1 + $0x2c] sm:$0xf]
        %v765 = vld [vmem:[%s1 + $0x30] sm:$0xf]
        %v766 = vld [vmem:[%s1 + $0x34] sm:$0xf]
        %v767 = vld [vmem:[%s1 + $0x38] sm:$0xf]
        %v768 = vld [vmem:[%s1 + $0x3c] sm:$0xf]
        %v785 = vunpack.c.l.b16 %v753
        %v786 = vunpack.c.l.b16 %v754
        %v787 = vunpack.c.l.b16 %v755
        %v788 = vunpack.c.l.b16 %v756
        %v789 = vunpack.c.l.b16 %v757
        %v790 = vunpack.c.l.b16 %v758
        %v791 = vunpack.c.l.b16 %v759
        %v792 = vunpack.c.l.b16 %v760
        %v793 = vunpack.c.l.b16 %v761
        %v794 = vunpack.c.l.b16 %v762
        %v795 = vunpack.c.l.b16 %v763
        %v796 = vunpack.c.l.b16 %v764
        %v797 = vunpack.c.l.b16 %v765
        %v798 = vunpack.c.l.b16 %v766
        %v799 = vunpack.c.l.b16 %v767
        %v800 = vunpack.c.l.b16 %v768
        %v801 = vpack.c.b16 %v786, %v785
        %v802 = vpack.c.b16 %v788, %v787
        %v803 = vpack.c.b16 %v790, %v789
        %v804 = vpack.c.b16 %v792, %v791
        %v805 = vpack.c.b16 %v794, %v793
        %v806 = vpack.c.b16 %v796, %v795
        %v807 = vpack.c.b16 %v798, %v797
        %v808 = vpack.c.b16 %v800, %v799
        %817 = vmatpush.bf16.msra.mxu0 %v808
        %818 = vmatpush.bf16.msra.mxu0 %v807
        %819 = vmatpush.bf16.msra.mxu0 %v806
        %820 = vmatpush.bf16.msra.mxu0 %v805
        %821 = vmatpush.bf16.msra.mxu0 %v804
        %822 = vmatpush.bf16.msra.mxu0 %v803
        %823 = vmatpush.bf16.msra.mxu0 %v802
        %824 = vmatpush.bf16.msra.mxu0 %v801
        %825 = vmatmul.bf16.gmra.mxu0 %v749
        %v826 = vpop.f32.mrf.mxu0
        %v827 = vadd.f32 0.0, %v826
        %v828 = vpop.f32.mrf.mxu0
        %v829 = vadd.f32 0.0, %v828
        %830 = vmatmul.bf16.gmra.mxu0 %v750
        %v831 = vpop.f32.mrf.mxu0
        %v832 = vadd.f32 0.0, %v831
        %v833 = vpop.f32.mrf.mxu0
        %v834 = vadd.f32 0.0, %v833
        %835 = vmatmul.bf16.gmra.mxu0 %v751
        %v836 = vpop.f32.mrf.mxu0
        %v837 = vadd.f32 0.0, %v836
        %v838 = vpop.f32.mrf.mxu0
        %v839 = vadd.f32 0.0, %v838
        %840 = vmatmul.bf16.gmra.mxu0 %v752
        %v841 = vpop.f32.mrf.mxu0
        %v842 = vadd.f32 0.0, %v841
        %v843 = vpop.f32.mrf.mxu0
        %v844 = vadd.f32 0.0, %v843
        %845 = vdwg.mxu0
        %846 = vrot.lane.b32.xlu0 %v827, 64
        %v847 = vpop.permute.xlu0 %846
        %848 = vrot.lane.b32.xlu0 %v829, 64
        %v849 = vpop.permute.xlu0 %848
        %850 = vrot.lane.b32.xlu0 %v832, 64
        %v851 = vpop.permute.xlu0 %850
        %852 = vrot.lane.b32.xlu0 %v834, 64
        %v853 = vpop.permute.xlu0 %852
        %854 = vrot.lane.b32.xlu0 %v837, 64
        %v855 = vpop.permute.xlu0 %854
        %856 = vrot.lane.b32.xlu0 %v839, 64
        %v857 = vpop.permute.xlu0 %856
        %858 = vrot.lane.b32.xlu0 %v842, 64
        %v859 = vpop.permute.xlu0 %858
        %860 = vrot.lane.b32.xlu0 %v844, 64
        %v861 = vpop.permute.xlu0 %860
        %v862 = vmax.f32 %v827, %v847
        %v863 = vmax.f32 %v829, %v849
        %v864 = vmax.f32 %v832, %v851
        %v865 = vmax.f32 %v834, %v853
        %v866 = vmax.f32 %v837, %v855
        %v867 = vmax.f32 %v839, %v857
        %v868 = vmax.f32 %v842, %v859
        %v869 = vmax.f32 %v844, %v861
        %870 = vrot.lane.b32.xlu0 %v862, 32
        %v871 = vpop.permute.xlu0 %870
        %872 = vrot.lane.b32.xlu0 %v863, 32
        %v873 = vpop.permute.xlu0 %872
        %874 = vrot.lane.b32.xlu0 %v864, 32
        %v875 = vpop.permute.xlu0 %874
        %876 = vrot.lane.b32.xlu0 %v865, 32
        %v877 = vpop.permute.xlu0 %876
        %878 = vrot.lane.b32.xlu0 %v866, 32
        %v879 = vpop.permute.xlu0 %878
        %880 = vrot.lane.b32.xlu0 %v867, 32
        %v881 = vpop.permute.xlu0 %880
        %882 = vrot.lane.b32.xlu0 %v868, 32
        %v883 = vpop.permute.xlu0 %882
        %884 = vrot.lane.b32.xlu0 %v869, 32
        %v885 = vpop.permute.xlu0 %884
        %v886 = vmax.f32 %v862, %v871
        %v887 = vmax.f32 %v863, %v873
        %v888 = vmax.f32 %v864, %v875
        %v889 = vmax.f32 %v865, %v877
        %v890 = vmax.f32 %v866, %v879
        %v891 = vmax.f32 %v867, %v881
        %v892 = vmax.f32 %v868, %v883
        %v893 = vmax.f32 %v869, %v885
        %894 = vrot.lane.b32.xlu0 %v886, 16
        %v895 = vpop.permute.xlu0 %894
        %896 = vrot.lane.b32.xlu0 %v887, 16
        %v897 = vpop.permute.xlu0 %896
        %898 = vrot.lane.b32.xlu0 %v888, 16
        %v899 = vpop.permute.xlu0 %898
        %900 = vrot.lane.b32.xlu0 %v889, 16
        %v901 = vpop.permute.xlu0 %900
        %902 = vrot.lane.b32.xlu0 %v890, 16
        %v903 = vpop.permute.xlu0 %902
        %904 = vrot.lane.b32.xlu0 %v891, 16
        %v905 = vpop.permute.xlu0 %904
        %906 = vrot.lane.b32.xlu0 %v892, 16
        %v907 = vpop.permute.xlu0 %906
        %908 = vrot.lane.b32.xlu0 %v893, 16
        %v909 = vpop.permute.xlu0 %908
        %v910 = vmax.f32 %v886, %v895
        %v911 = vmax.f32 %v887, %v897
        %v912 = vmax.f32 %v888, %v899
        %v913 = vmax.f32 %v889, %v901
        %v914 = vmax.f32 %v890, %v903
        %v915 = vmax.f32 %v891, %v905
        %v916 = vmax.f32 %v892, %v907
        %v917 = vmax.f32 %v893, %v909
        %v918 = vld [vmem:[%s5] sm:$0x1]
        %v920 = vperm.slane %v918, 0
        %v922 = vadd.f32 %v910, %v920
        %v923 = vadd.f32 %v911, %v920
        %v924 = vadd.f32 %v912, %v920
        %v925 = vadd.f32 %v913, %v920
        %v926 = vadd.f32 %v914, %v920
        %v927 = vadd.f32 %v915, %v920
        %v928 = vadd.f32 %v916, %v920
        %v929 = vadd.f32 %v917, %v920
        %v930 = vmax.f32 %v922, 0.0
        %v931 = vmax.f32 %v923, 0.0
        %v932 = vmax.f32 %v924, 0.0
        %v933 = vmax.f32 %v925, 0.0
        %v934 = vmax.f32 %v926, 0.0
        %v935 = vmax.f32 %v927, 0.0
        %v936 = vmax.f32 %v928, 0.0
        %v937 = vmax.f32 %v929, 0.0
        %938 = vst [vmem:[#allocation3] sm:$0xff] 0.0
        %939 = vst [vmem:[#allocation3 + $0x8] sm:$0xff] 0.0
        %940 = vst [vmem:[#allocation3 + $0x49] sm:$0xff] 0.0
        %941 = vst [vmem:[#allocation3 + $0x51] sm:$0xff] 0.0
        %942 = vst [vmem:[#allocation3 + $0x59] sm:$0x7f] 0.0
        %943 = vst.msk [vmem:[#allocation3 + $0x10] sm:$0xff] %vm389, %v930
        %944 = vst.msk [vmem:[#allocation3 + $0x18] sm:$0xff] %vm389, %v931
        %945 = vst.msk [vmem:[#allocation3 + $0x20] sm:$0xff] %vm389, %v932
        %946 = vst.msk [vmem:[#allocation3 + $0x28] sm:$0xff] %vm389, %v933
        %947 = vst.msk [vmem:[#allocation3 + $0x30] sm:$0xff] %vm389, %v934
        %948 = vst.msk [vmem:[#allocation3 + $0x38] sm:$0xff] %vm389, %v935
        %949 = vst.msk [vmem:[#allocation3 + $0x40] sm:$0xff] %vm389, %v936
        %950 = vst.msk [vmem:[#allocation3 + $0x48] sm:$0xff] %vm389, %v937
        %959 = vrot.lane.b32.xlu0 %v930, 16
        %v960 = vpop.permute.xlu0 %959
        %961 = vrot.lane.b32.xlu0 %v931, 16
        %v962 = vpop.permute.xlu0 %961
        %963 = vrot.lane.b32.xlu0 %v932, 16
        %v964 = vpop.permute.xlu0 %963
        %965 = vrot.lane.b32.xlu0 %v933, 16
        %v966 = vpop.permute.xlu0 %965
        %967 = vrot.lane.b32.xlu0 %v934, 16
        %v968 = vpop.permute.xlu0 %967
        %969 = vrot.lane.b32.xlu0 %v935, 16
        %v970 = vpop.permute.xlu0 %969
        %971 = vrot.lane.b32.xlu0 %v936, 16
        %v972 = vpop.permute.xlu0 %971
        %973 = vrot.lane.b32.xlu0 %v937, 16
        %v974 = vpop.permute.xlu0 %973
        %983 = vst.msk [vmem:[#allocation3 + $0xf] sm:$0xff] %vm438, %v960
        %984 = vst.msk [vmem:[#allocation3 + $0x17] sm:$0xff] %vm438, %v962
        %985 = vst.msk [vmem:[#allocation3 + $0x1f] sm:$0xff] %vm438, %v964
        %986 = vst.msk [vmem:[#allocation3 + $0x27] sm:$0xff] %vm438, %v966
        %987 = vst.msk [vmem:[#allocation3 + $0x2f] sm:$0xff] %vm438, %v968
        %988 = vst.msk [vmem:[#allocation3 + $0x37] sm:$0xff] %vm438, %v970
        %989 = vst.msk [vmem:[#allocation3 + $0x3f] sm:$0xff] %vm438, %v972
        %990 = vst.msk [vmem:[#allocation3 + $0x47] sm:$0xff] %vm438, %v974
        %991 = vrot.lane.b32.xlu0 %v930, 32
        %v992 = vpop.permute.xlu0 %991
        %993 = vrot.lane.b32.xlu0 %v931, 32
        %v994 = vpop.permute.xlu0 %993
        %995 = vrot.lane.b32.xlu0 %v932, 32
        %v996 = vpop.permute.xlu0 %995
        %997 = vrot.lane.b32.xlu0 %v933, 32
        %v998 = vpop.permute.xlu0 %997
        %999 = vrot.lane.b32.xlu0 %v934, 32
        %v1000 = vpop.permute.xlu0 %999
        %1001 = vrot.lane.b32.xlu0 %v935, 32
        %v1002 = vpop.permute.xlu0 %1001
        %1003 = vrot.lane.b32.xlu0 %v936, 32
        %v1004 = vpop.permute.xlu0 %1003
        %1005 = vrot.lane.b32.xlu0 %v937, 32
        %v1006 = vpop.permute.xlu0 %1005
        %1015 = vst.msk [vmem:[#allocation3 + $0xe] sm:$0xff] %vm487, %v992
        %1016 = vst.msk [vmem:[#allocation3 + $0x16] sm:$0xff] %vm487, %v994
        %1017 = vst.msk [vmem:[#allocation3 + $0x1e] sm:$0xff] %vm487, %v996
        %1018 = vst.msk [vmem:[#allocation3 + $0x26] sm:$0xff] %vm487, %v998
        %1019 = vst.msk [vmem:[#allocation3 + $0x2e] sm:$0xff] %vm487, %v1000
        %1020 = vst.msk [vmem:[#allocation3 + $0x36] sm:$0xff] %vm487, %v1002
        %1021 = vst.msk [vmem:[#allocation3 + $0x3e] sm:$0xff] %vm487, %v1004
        %1022 = vst.msk [vmem:[#allocation3 + $0x46] sm:$0xff] %vm487, %v1006
        %1023 = vrot.lane.b32.xlu0 %v930, 48
        %v1024 = vpop.permute.xlu0 %1023
        %1025 = vrot.lane.b32.xlu0 %v931, 48
        %v1026 = vpop.permute.xlu0 %1025
        %1027 = vrot.lane.b32.xlu0 %v932, 48
        %v1028 = vpop.permute.xlu0 %1027
        %1029 = vrot.lane.b32.xlu0 %v933, 48
        %v1030 = vpop.permute.xlu0 %1029
        %1031 = vrot.lane.b32.xlu0 %v934, 48
        %v1032 = vpop.permute.xlu0 %1031
        %1033 = vrot.lane.b32.xlu0 %v935, 48
        %v1034 = vpop.permute.xlu0 %1033
        %1035 = vrot.lane.b32.xlu0 %v936, 48
        %v1036 = vpop.permute.xlu0 %1035
        %1037 = vrot.lane.b32.xlu0 %v937, 48
        %v1038 = vpop.permute.xlu0 %1037
        %1047 = vst.msk [vmem:[#allocation3 + $0xd] sm:$0xff] %vm536, %v1024
        %1048 = vst.msk [vmem:[#allocation3 + $0x15] sm:$0xff] %vm536, %v1026
        %1049 = vst.msk [vmem:[#allocation3 + $0x1d] sm:$0xff] %vm536, %v1028
        %1050 = vst.msk [vmem:[#allocation3 + $0x25] sm:$0xff] %vm536, %v1030
        %1051 = vst.msk [vmem:[#allocation3 + $0x2d] sm:$0xff] %vm536, %v1032
        %1052 = vst.msk [vmem:[#allocation3 + $0x35] sm:$0xff] %vm536, %v1034
        %1053 = vst.msk [vmem:[#allocation3 + $0x3d] sm:$0xff] %vm536, %v1036
        %1054 = vst.msk [vmem:[#allocation3 + $0x45] sm:$0xff] %vm536, %v1038
        %1055 = vrot.lane.b32.xlu0 %v930, 64
        %v1056 = vpop.permute.xlu0 %1055
        %1057 = vrot.lane.b32.xlu0 %v931, 64
        %v1058 = vpop.permute.xlu0 %1057
        %1059 = vrot.lane.b32.xlu0 %v932, 64
        %v1060 = vpop.permute.xlu0 %1059
        %1061 = vrot.lane.b32.xlu0 %v933, 64
        %v1062 = vpop.permute.xlu0 %1061
        %1063 = vrot.lane.b32.xlu0 %v934, 64
        %v1064 = vpop.permute.xlu0 %1063
        %1065 = vrot.lane.b32.xlu0 %v935, 64
        %v1066 = vpop.permute.xlu0 %1065
        %1067 = vrot.lane.b32.xlu0 %v936, 64
        %v1068 = vpop.permute.xlu0 %1067
        %1069 = vrot.lane.b32.xlu0 %v937, 64
        %v1070 = vpop.permute.xlu0 %1069
        %1079 = vst.msk [vmem:[#allocation3 + $0xc] sm:$0xff] %vm585, %v1056
        %1080 = vst.msk [vmem:[#allocation3 + $0x14] sm:$0xff] %vm585, %v1058
        %1081 = vst.msk [vmem:[#allocation3 + $0x1c] sm:$0xff] %vm585, %v1060
        %1082 = vst.msk [vmem:[#allocation3 + $0x24] sm:$0xff] %vm585, %v1062
        %1083 = vst.msk [vmem:[#allocation3 + $0x2c] sm:$0xff] %vm585, %v1064
        %1084 = vst.msk [vmem:[#allocation3 + $0x34] sm:$0xff] %vm585, %v1066
        %1085 = vst.msk [vmem:[#allocation3 + $0x3c] sm:$0xff] %vm585, %v1068
        %1086 = vst.msk [vmem:[#allocation3 + $0x44] sm:$0xff] %vm585, %v1070
        %1087 = vrot.lane.b32.xlu0 %v930, 80
        %v1088 = vpop.permute.xlu0 %1087
        %1089 = vrot.lane.b32.xlu0 %v931, 80
        %v1090 = vpop.permute.xlu0 %1089
        %1091 = vrot.lane.b32.xlu0 %v932, 80
        %v1092 = vpop.permute.xlu0 %1091
        %1093 = vrot.lane.b32.xlu0 %v933, 80
        %v1094 = vpop.permute.xlu0 %1093
        %1095 = vrot.lane.b32.xlu0 %v934, 80
        %v1096 = vpop.permute.xlu0 %1095
        %1097 = vrot.lane.b32.xlu0 %v935, 80
        %v1098 = vpop.permute.xlu0 %1097
        %1099 = vrot.lane.b32.xlu0 %v936, 80
        %v1100 = vpop.permute.xlu0 %1099
        %1101 = vrot.lane.b32.xlu0 %v937, 80
        %v1102 = vpop.permute.xlu0 %1101
        %1111 = vst.msk [vmem:[#allocation3 + $0xb] sm:$0xff] %vm634, %v1088
        %1112 = vst.msk [vmem:[#allocation3 + $0x13] sm:$0xff] %vm634, %v1090
        %1113 = vst.msk [vmem:[#allocation3 + $0x1b] sm:$0xff] %vm634, %v1092
        %1114 = vst.msk [vmem:[#allocation3 + $0x23] sm:$0xff] %vm634, %v1094
        %1115 = vst.msk [vmem:[#allocation3 + $0x2b] sm:$0xff] %vm634, %v1096
        %1116 = vst.msk [vmem:[#allocation3 + $0x33] sm:$0xff] %vm634, %v1098
        %1117 = vst.msk [vmem:[#allocation3 + $0x3b] sm:$0xff] %vm634, %v1100
        %1118 = vst.msk [vmem:[#allocation3 + $0x43] sm:$0xff] %vm634, %v1102
        %1119 = vrot.lane.b32.xlu0 %v930, 96
        %v1120 = vpop.permute.xlu0 %1119
        %1121 = vrot.lane.b32.xlu0 %v931, 96
        %v1122 = vpop.permute.xlu0 %1121
        %1123 = vrot.lane.b32.xlu0 %v932, 96
        %v1124 = vpop.permute.xlu0 %1123
        %1125 = vrot.lane.b32.xlu0 %v933, 96
        %v1126 = vpop.permute.xlu0 %1125
        %1127 = vrot.lane.b32.xlu0 %v934, 96
        %v1128 = vpop.permute.xlu0 %1127
        %1129 = vrot.lane.b32.xlu0 %v935, 96
        %v1130 = vpop.permute.xlu0 %1129
        %1131 = vrot.lane.b32.xlu0 %v936, 96
        %v1132 = vpop.permute.xlu0 %1131
        %1133 = vrot.lane.b32.xlu0 %v937, 96
        %v1134 = vpop.permute.xlu0 %1133
        %1143 = vst.msk [vmem:[#allocation3 + $0xa] sm:$0xff] %vm683, %v1120
        %1144 = vst.msk [vmem:[#allocation3 + $0x12] sm:$0xff] %vm683, %v1122
        %1145 = vst.msk [vmem:[#allocation3 + $0x1a] sm:$0xff] %vm683, %v1124
        %1146 = vst.msk [vmem:[#allocation3 + $0x22] sm:$0xff] %vm683, %v1126
        %1147 = vst.msk [vmem:[#allocation3 + $0x2a] sm:$0xff] %vm683, %v1128
        %1148 = vst.msk [vmem:[#allocation3 + $0x32] sm:$0xff] %vm683, %v1130
        %1149 = vst.msk [vmem:[#allocation3 + $0x3a] sm:$0xff] %vm683, %v1132
        %1150 = vst.msk [vmem:[#allocation3 + $0x42] sm:$0xff] %vm683, %v1134
        %1151 = vrot.lane.b32.xlu0 %v930, 112
        %v1152 = vpop.permute.xlu0 %1151
        %1153 = vrot.lane.b32.xlu0 %v931, 112
        %v1154 = vpop.permute.xlu0 %1153
        %1155 = vrot.lane.b32.xlu0 %v932, 112
        %v1156 = vpop.permute.xlu0 %1155
        %1157 = vrot.lane.b32.xlu0 %v933, 112
        %v1158 = vpop.permute.xlu0 %1157
        %1159 = vrot.lane.b32.xlu0 %v934, 112
        %v1160 = vpop.permute.xlu0 %1159
        %1161 = vrot.lane.b32.xlu0 %v935, 112
        %v1162 = vpop.permute.xlu0 %1161
        %1163 = vrot.lane.b32.xlu0 %v936, 112
        %v1164 = vpop.permute.xlu0 %1163
        %1165 = vrot.lane.b32.xlu0 %v937, 112
        %v1166 = vpop.permute.xlu0 %1165
        %1175 = vst.msk [vmem:[#allocation3 + $0x9] sm:$0xff] %vm732, %v1152
        %1176 = vst.msk [vmem:[#allocation3 + $0x11] sm:$0xff] %vm732, %v1154
        %1177 = vst.msk [vmem:[#allocation3 + $0x19] sm:$0xff] %vm732, %v1156
        %1178 = vst.msk [vmem:[#allocation3 + $0x21] sm:$0xff] %vm732, %v1158
        %1179 = vst.msk [vmem:[#allocation3 + $0x29] sm:$0xff] %vm732, %v1160
        %1180 = vst.msk [vmem:[#allocation3 + $0x31] sm:$0xff] %vm732, %v1162
        %1181 = vst.msk [vmem:[#allocation3 + $0x39] sm:$0xff] %vm732, %v1164
        %1182 = vst.msk [vmem:[#allocation3 + $0x41] sm:$0xff] %vm732, %v1166
        %v1183 = vld [vmem:[#allocation3] ss:$2 sm:$0xff]
        %s1184 = scalar_lea.vmem [#allocation3], 16
        %v1185 = vld [vmem:[%s1184] ss:$2 sm:$0xff]
        %s1186 = scalar_lea.vmem [#allocation3], 32
        %v1187 = vld [vmem:[%s1186] ss:$2 sm:$0xff]
        %s1188 = scalar_lea.vmem [#allocation3], 48
        %v1189 = vld [vmem:[%s1188] ss:$2 sm:$0xff]
        %v1190 = vpack.c.bf16 %v1183, %v1183
        %v1191 = vpack.c.bf16 %v1185, %v1185
        %v1192 = vpack.c.bf16 %v1187, %v1187
        %v1193 = vpack.c.bf16 %v1189, %v1189
        %1194 = vst [vmem:[#allocation4] sm:$0xf] %v1190
        %1195 = vst [vmem:[#allocation4 + $0x10] sm:$0xf] %v1191
        %1196 = vst [vmem:[#allocation4 + $0x20] sm:$0xf] %v1192
        %1197 = vst [vmem:[#allocation4 + $0x30] sm:$0xf] %v1193
        %s1198 = scalar_lea.vmem [#allocation3], 8
        %v1199 = vld [vmem:[%s1198] ss:$2 sm:$0xff]
        %s1200 = scalar_lea.vmem [#allocation3], 24
        %v1201 = vld [vmem:[%s1200] ss:$2 sm:$0xff]
        %s1202 = scalar_lea.vmem [#allocation3], 40
        %v1203 = vld [vmem:[%s1202] ss:$2 sm:$0xff]
        %s1204 = scalar_lea.vmem [#allocation3], 56
        %v1205 = vld [vmem:[%s1204] ss:$2 sm:$0xff]
        %v1206 = vpack.c.bf16 %v1199, %v1199
        %v1207 = vpack.c.bf16 %v1201, %v1201
        %v1208 = vpack.c.bf16 %v1203, %v1203
        %v1209 = vpack.c.bf16 %v1205, %v1205
        %1210 = vst [vmem:[#allocation4 + $0x4] sm:$0xf] %v1206
        %1211 = vst [vmem:[#allocation4 + $0x14] sm:$0xf] %v1207
        %1212 = vst [vmem:[#allocation4 + $0x24] sm:$0xf] %v1208
        %1213 = vst [vmem:[#allocation4 + $0x34] sm:$0xf] %v1209
        %v1214 = vld [vmem:[%s1184] ss:$2 sm:$0xff]
        %v1215 = vld [vmem:[%s1186] ss:$2 sm:$0xff]
        %v1216 = vld [vmem:[%s1188] ss:$2 sm:$0xff]
        %s1217 = scalar_lea.vmem [#allocation3], 64
        %v1218 = vld [vmem:[%s1217] ss:$2 sm:$0xff]
        %v1219 = vpack.c.bf16 %v1214, %v1214
        %v1220 = vpack.c.bf16 %v1215, %v1215
        %v1221 = vpack.c.bf16 %v1216, %v1216
        %v1222 = vpack.c.bf16 %v1218, %v1218
        %1223 = vst [vmem:[#allocation4 + $0x8] sm:$0xf] %v1219
        %1224 = vst [vmem:[#allocation4 + $0x18] sm:$0xf] %v1220
        %1225 = vst [vmem:[#allocation4 + $0x28] sm:$0xf] %v1221
        %1226 = vst [vmem:[#allocation4 + $0x38] sm:$0xf] %v1222
        %v1227 = vld [vmem:[%s1200] ss:$2 sm:$0xff]
        %v1228 = vld [vmem:[%s1202] ss:$2 sm:$0xff]
        %v1229 = vld [vmem:[%s1204] ss:$2 sm:$0xff]
        %s1230 = scalar_lea.vmem [#allocation3], 72
        %v1231 = vld [vmem:[%s1230] ss:$2 sm:$0xff]
        %v1232 = vpack.c.bf16 %v1227, %v1227
        %v1233 = vpack.c.bf16 %v1228, %v1228
        %v1234 = vpack.c.bf16 %v1229, %v1229
        %v1235 = vpack.c.bf16 %v1231, %v1231
        %1236 = vst [vmem:[#allocation4 + $0xc] sm:$0xf] %v1232
        %1237 = vst [vmem:[#allocation4 + $0x1c] sm:$0xf] %v1233
        %1238 = vst [vmem:[#allocation4 + $0x2c] sm:$0xf] %v1234
        %1239 = vst [vmem:[#allocation4 + $0x3c] sm:$0xf] %v1235
        %v1240 = vld [vmem:[#allocation4] sm:$0xff]
        %v1241 = vld [vmem:[#allocation4 + $0x8] sm:$0xff]
        %v1242 = vld [vmem:[#allocation4 + $0x10] sm:$0xff]
        %v1243 = vld [vmem:[#allocation4 + $0x18] sm:$0xff]
        %v1244 = vld [vmem:[#allocation4 + $0x20] sm:$0xff]
        %v1245 = vld [vmem:[#allocation4 + $0x28] sm:$0xff]
        %v1246 = vld [vmem:[#allocation4 + $0x30] sm:$0xff]
        %v1247 = vld [vmem:[#allocation4 + $0x38] sm:$0xff]
        %v1248 = vld [vmem:[#allocation9] sm:$0xf]
        %v1249 = vld [vmem:[#allocation9 + $0x4] sm:$0xf]
        %v1250 = vld [vmem:[#allocation9 + $0x8] sm:$0xf]
        %v1251 = vld [vmem:[#allocation9 + $0xc] sm:$0xf]
        %v1252 = vld [vmem:[#allocation9 + $0x10] sm:$0xf]
        %v1253 = vld [vmem:[#allocation9 + $0x14] sm:$0xf]
        %v1254 = vld [vmem:[#allocation9 + $0x18] sm:$0xf]
        %v1255 = vld [vmem:[#allocation9 + $0x1c] sm:$0xf]
        %v1256 = vld [vmem:[#allocation9 + $0x20] sm:$0xf]
        %v1257 = vld [vmem:[#allocation9 + $0x24] sm:$0xf]
        %v1258 = vld [vmem:[#allocation9 + $0x28] sm:$0xf]
        %v1259 = vld [vmem:[#allocation9 + $0x2c] sm:$0xf]
        %v1260 = vld [vmem:[#allocation9 + $0x30] sm:$0xf]
        %v1261 = vld [vmem:[#allocation9 + $0x34] sm:$0xf]
        %v1262 = vld [vmem:[#allocation9 + $0x38] sm:$0xf]
        %v1263 = vld [vmem:[#allocation9 + $0x3c] sm:$0xf]
        %v1264 = vld [vmem:[#allocation9 + $0x40] sm:$0xf]
        %v1265 = vld [vmem:[#allocation9 + $0x44] sm:$0xf]
        %v1266 = vld [vmem:[#allocation9 + $0x48] sm:$0xf]
        %v1267 = vld [vmem:[#allocation9 + $0x4c] sm:$0xf]
        %v1268 = vld [vmem:[#allocation9 + $0x50] sm:$0xf]
        %v1269 = vld [vmem:[#allocation9 + $0x54] sm:$0xf]
        %v1270 = vld [vmem:[#allocation9 + $0x58] sm:$0xf]
        %v1271 = vld [vmem:[#allocation9 + $0x5c] sm:$0xf]
        %v1272 = vld [vmem:[#allocation9 + $0x60] sm:$0xf]
        %v1273 = vld [vmem:[#allocation9 + $0x64] sm:$0xf]
        %v1274 = vld [vmem:[#allocation9 + $0x68] sm:$0xf]
        %v1275 = vld [vmem:[#allocation9 + $0x6c] sm:$0xf]
        %v1276 = vld [vmem:[#allocation9 + $0x70] sm:$0xf]
        %v1277 = vld [vmem:[#allocation9 + $0x74] sm:$0xf]
        %v1278 = vld [vmem:[#allocation9 + $0x78] sm:$0xf]
        %v1279 = vld [vmem:[#allocation9 + $0x7c] sm:$0xf]
        %v1280 = vld [vmem:[#allocation9 + $0x80] sm:$0xf]
        %v1281 = vld [vmem:[#allocation9 + $0x84] sm:$0xf]
        %v1282 = vld [vmem:[#allocation9 + $0x88] sm:$0xf]
        %v1283 = vld [vmem:[#allocation9 + $0x8c] sm:$0xf]
        %v1284 = vld [vmem:[#allocation9 + $0x90] sm:$0xf]
        %v1285 = vld [vmem:[#allocation9 + $0x94] sm:$0xf]
        %v1286 = vld [vmem:[#allocation9 + $0x98] sm:$0xf]
        %v1287 = vld [vmem:[#allocation9 + $0x9c] sm:$0xf]
        %v1288 = vld [vmem:[#allocation9 + $0xa0] sm:$0xf]
        %v1289 = vld [vmem:[#allocation9 + $0xa4] sm:$0xf]
        %v1290 = vld [vmem:[#allocation9 + $0xa8] sm:$0xf]
        %v1291 = vld [vmem:[#allocation9 + $0xac] sm:$0xf]
        %v1292 = vld [vmem:[#allocation9 + $0xb0] sm:$0xf]
        %v1293 = vld [vmem:[#allocation9 + $0xb4] sm:$0xf]
        %v1294 = vld [vmem:[#allocation9 + $0xb8] sm:$0xf]
        %v1295 = vld [vmem:[#allocation9 + $0xbc] sm:$0xf]
        %v1296 = vld [vmem:[#allocation9 + $0xc0] sm:$0xf]
        %v1297 = vld [vmem:[#allocation9 + $0xc4] sm:$0xf]
        %v1298 = vld [vmem:[#allocation9 + $0xc8] sm:$0xf]
        %v1299 = vld [vmem:[#allocation9 + $0xcc] sm:$0xf]
        %v1300 = vld [vmem:[#allocation9 + $0xd0] sm:$0xf]
        %v1301 = vld [vmem:[#allocation9 + $0xd4] sm:$0xf]
        %v1302 = vld [vmem:[#allocation9 + $0xd8] sm:$0xf]
        %v1303 = vld [vmem:[#allocation9 + $0xdc] sm:$0xf]
        %v1304 = vld [vmem:[#allocation9 + $0xe0] sm:$0xf]
        %v1305 = vld [vmem:[#allocation9 + $0xe4] sm:$0xf]
        %v1306 = vld [vmem:[#allocation9 + $0xe8] sm:$0xf]
        %v1307 = vld [vmem:[#allocation9 + $0xec] sm:$0xf]
        %v1308 = vld [vmem:[#allocation9 + $0xf0] sm:$0xf]
        %v1309 = vld [vmem:[#allocation9 + $0xf4] sm:$0xf]
        %v1310 = vld [vmem:[#allocation9 + $0xf8] sm:$0xf]
        %v1311 = vld [vmem:[#allocation9 + $0xfc] sm:$0xf]
        %v1320 = vunpack.c.l.b16 %v1240
        %v1321 = vunpack.c.h.b16 %v1240
        %v1322 = vunpack.c.l.b16 %v1241
        %v1323 = vunpack.c.h.b16 %v1241
        %v1324 = vunpack.c.l.b16 %v1242
        %v1325 = vunpack.c.h.b16 %v1242
        %v1326 = vunpack.c.l.b16 %v1243
        %v1327 = vunpack.c.h.b16 %v1243
        %v1328 = vunpack.c.l.b16 %v1244
        %v1329 = vunpack.c.h.b16 %v1244
        %v1330 = vunpack.c.l.b16 %v1245
        %v1331 = vunpack.c.h.b16 %v1245
        %v1332 = vunpack.c.l.b16 %v1246
        %v1333 = vunpack.c.h.b16 %v1246
        %v1334 = vunpack.c.l.b16 %v1247
        %v1335 = vunpack.c.h.b16 %v1247
        %v1336 = vpack.c.b16 %v1324, %v1320
        %v1337 = vpack.c.b16 %v1325, %v1321
        %v1338 = vpack.c.b16 %v1326, %v1322
        %v1339 = vpack.c.b16 %v1327, %v1323
        %v1340 = vpack.c.b16 %v1332, %v1328
        %v1341 = vpack.c.b16 %v1333, %v1329
        %v1342 = vpack.c.b16 %v1334, %v1330
        %v1343 = vpack.c.b16 %v1335, %v1331
        %v1416 = vunpack.c.l.b16 %v1248
        %v1417 = vunpack.c.l.b16 %v1249
        %v1418 = vunpack.c.l.b16 %v1250
        %v1419 = vunpack.c.l.b16 %v1251
        %v1420 = vunpack.c.l.b16 %v1252
        %v1421 = vunpack.c.l.b16 %v1253
        %v1422 = vunpack.c.l.b16 %v1254
        %v1423 = vunpack.c.l.b16 %v1255
        %v1424 = vunpack.c.l.b16 %v1256
        %v1425 = vunpack.c.l.b16 %v1257
        %v1426 = vunpack.c.l.b16 %v1258
        %v1427 = vunpack.c.l.b16 %v1259
        %v1428 = vunpack.c.l.b16 %v1260
        %v1429 = vunpack.c.l.b16 %v1261
        %v1430 = vunpack.c.l.b16 %v1262
        %v1431 = vunpack.c.l.b16 %v1263
        %v1432 = vunpack.c.l.b16 %v1264
        %v1433 = vunpack.c.l.b16 %v1265
        %v1434 = vunpack.c.l.b16 %v1266
        %v1435 = vunpack.c.l.b16 %v1267
        %v1436 = vunpack.c.l.b16 %v1268
        %v1437 = vunpack.c.l.b16 %v1269
        %v1438 = vunpack.c.l.b16 %v1270
        %v1439 = vunpack.c.l.b16 %v1271
        %v1440 = vunpack.c.l.b16 %v1272
        %v1441 = vunpack.c.l.b16 %v1273
        %v1442 = vunpack.c.l.b16 %v1274
        %v1443 = vunpack.c.l.b16 %v1275
        %v1444 = vunpack.c.l.b16 %v1276
        %v1445 = vunpack.c.l.b16 %v1277
        %v1446 = vunpack.c.l.b16 %v1278
        %v1447 = vunpack.c.l.b16 %v1279
        %v1448 = vunpack.c.l.b16 %v1280
        %v1449 = vunpack.c.l.b16 %v1281
        %v1450 = vunpack.c.l.b16 %v1282
        %v1451 = vunpack.c.l.b16 %v1283
        %v1452 = vunpack.c.l.b16 %v1284
        %v1453 = vunpack.c.l.b16 %v1285
        %v1454 = vunpack.c.l.b16 %v1286
        %v1455 = vunpack.c.l.b16 %v1287
        %v1456 = vunpack.c.l.b16 %v1288
        %v1457 = vunpack.c.l.b16 %v1289
        %v1458 = vunpack.c.l.b16 %v1290
        %v1459 = vunpack.c.l.b16 %v1291
        %v1460 = vunpack.c.l.b16 %v1292
        %v1461 = vunpack.c.l.b16 %v1293
        %v1462 = vunpack.c.l.b16 %v1294
        %v1463 = vunpack.c.l.b16 %v1295
        %v1464 = vunpack.c.l.b16 %v1296
        %v1465 = vunpack.c.l.b16 %v1297
        %v1466 = vunpack.c.l.b16 %v1298
        %v1467 = vunpack.c.l.b16 %v1299
        %v1468 = vunpack.c.l.b16 %v1300
        %v1469 = vunpack.c.l.b16 %v1301
        %v1470 = vunpack.c.l.b16 %v1302
        %v1471 = vunpack.c.l.b16 %v1303
        %v1472 = vunpack.c.l.b16 %v1304
        %v1473 = vunpack.c.l.b16 %v1305
        %v1474 = vunpack.c.l.b16 %v1306
        %v1475 = vunpack.c.l.b16 %v1307
        %v1476 = vunpack.c.l.b16 %v1308
        %v1477 = vunpack.c.l.b16 %v1309
        %v1478 = vunpack.c.l.b16 %v1310
        %v1479 = vunpack.c.l.b16 %v1311
        %v1480 = vpack.c.b16 %v1417, %v1416
        %v1481 = vpack.c.b16 %v1419, %v1418
        %v1482 = vpack.c.b16 %v1421, %v1420
        %v1483 = vpack.c.b16 %v1423, %v1422
        %v1484 = vpack.c.b16 %v1425, %v1424
        %v1485 = vpack.c.b16 %v1427, %v1426
        %v1486 = vpack.c.b16 %v1429, %v1428
        %v1487 = vpack.c.b16 %v1431, %v1430
        %v1488 = vpack.c.b16 %v1433, %v1432
        %v1489 = vpack.c.b16 %v1435, %v1434
        %v1490 = vpack.c.b16 %v1437, %v1436
        %v1491 = vpack.c.b16 %v1439, %v1438
        %v1492 = vpack.c.b16 %v1441, %v1440
        %v1493 = vpack.c.b16 %v1443, %v1442
        %v1494 = vpack.c.b16 %v1445, %v1444
        %v1495 = vpack.c.b16 %v1447, %v1446
        %v1496 = vpack.c.b16 %v1449, %v1448
        %v1497 = vpack.c.b16 %v1451, %v1450
        %v1498 = vpack.c.b16 %v1453, %v1452
        %v1499 = vpack.c.b16 %v1455, %v1454
        %v1500 = vpack.c.b16 %v1457, %v1456
        %v1501 = vpack.c.b16 %v1459, %v1458
        %v1502 = vpack.c.b16 %v1461, %v1460
        %v1503 = vpack.c.b16 %v1463, %v1462
        %v1504 = vpack.c.b16 %v1465, %v1464
        %v1505 = vpack.c.b16 %v1467, %v1466
        %v1506 = vpack.c.b16 %v1469, %v1468
        %v1507 = vpack.c.b16 %v1471, %v1470
        %v1508 = vpack.c.b16 %v1473, %v1472
        %v1509 = vpack.c.b16 %v1475, %v1474
        %v1510 = vpack.c.b16 %v1477, %v1476
        %v1511 = vpack.c.b16 %v1479, %v1478
        %1544 = vmatpush.bf16.msra.mxu0 %v1487
        %1545 = vmatpush.bf16.msra.mxu0 %v1486
        %1546 = vmatpush.bf16.msra.mxu0 %v1485
        %1547 = vmatpush.bf16.msra.mxu0 %v1484
        %1548 = vmatpush.bf16.msra.mxu0 %v1483
        %1549 = vmatpush.bf16.msra.mxu0 %v1482
        %1550 = vmatpush.bf16.msra.mxu0 %v1481
        %1551 = vmatpush.bf16.msra.mxu0 %v1480
        %1552 = vmatmul.bf16.gmra.mxu0 %v1336
        %v1553 = vpop.f32.mrf.mxu0
        %v1554 = vadd.f32 0.0, %v1553
        %v1555 = vpop.f32.mrf.mxu0
        %v1556 = vadd.f32 0.0, %v1555
        %1557 = vmatmul.bf16.gmra.mxu0 %v1340
        %v1558 = vpop.f32.mrf.mxu0
        %v1559 = vadd.f32 0.0, %v1558
        %v1560 = vpop.f32.mrf.mxu0
        %v1561 = vadd.f32 0.0, %v1560
        %1562 = vdwg.mxu0
        %1563 = vmatpush.bf16.msra.mxu0 %v1495
        %1564 = vmatpush.bf16.msra.mxu0 %v1494
        %1565 = vmatpush.bf16.msra.mxu0 %v1493
        %1566 = vmatpush.bf16.msra.mxu0 %v1492
        %1567 = vmatpush.bf16.msra.mxu0 %v1491
        %1568 = vmatpush.bf16.msra.mxu0 %v1490
        %1569 = vmatpush.bf16.msra.mxu0 %v1489
        %1570 = vmatpush.bf16.msra.mxu0 %v1488
        %1571 = vmatmul.bf16.gmra.mxu0 %v1337
        %v1572 = vpop.f32.mrf.mxu0
        %v1573 = vadd.f32 %v1554, %v1572
        %v1574 = vpop.f32.mrf.mxu0
        %v1575 = vadd.f32 %v1556, %v1574
        %1576 = vmatmul.bf16.gmra.mxu0 %v1341
        %v1577 = vpop.f32.mrf.mxu0
        %v1578 = vadd.f32 %v1559, %v1577
        %v1579 = vpop.f32.mrf.mxu0
        %v1580 = vadd.f32 %v1561, %v1579
        %1581 = vdwg.mxu0
        %1582 = vmatpush.bf16.msra.mxu0 %v1503
        %1583 = vmatpush.bf16.msra.mxu0 %v1502
        %1584 = vmatpush.bf16.msra.mxu0 %v1501
        %1585 = vmatpush.bf16.msra.mxu0 %v1500
        %1586 = vmatpush.bf16.msra.mxu0 %v1499
        %1587 = vmatpush.bf16.msra.mxu0 %v1498
        %1588 = vmatpush.bf16.msra.mxu0 %v1497
        %1589 = vmatpush.bf16.msra.mxu0 %v1496
        %1590 = vmatmul.bf16.gmra.mxu0 %v1338
        %v1591 = vpop.f32.mrf.mxu0
        %v1592 = vadd.f32 %v1573, %v1591
        %v1593 = vpop.f32.mrf.mxu0
        %v1594 = vadd.f32 %v1575, %v1593
        %1595 = vmatmul.bf16.gmra.mxu0 %v1342
        %v1596 = vpop.f32.mrf.mxu0
        %v1597 = vadd.f32 %v1578, %v1596
        %v1598 = vpop.f32.mrf.mxu0
        %v1599 = vadd.f32 %v1580, %v1598
        %1600 = vdwg.mxu0
        %1601 = vmatpush.bf16.msra.mxu0 %v1511
        %1602 = vmatpush.bf16.msra.mxu0 %v1510
        %1603 = vmatpush.bf16.msra.mxu0 %v1509
        %1604 = vmatpush.bf16.msra.mxu0 %v1508
        %1605 = vmatpush.bf16.msra.mxu0 %v1507
        %1606 = vmatpush.bf16.msra.mxu0 %v1506
        %1607 = vmatpush.bf16.msra.mxu0 %v1505
        %1608 = vmatpush.bf16.msra.mxu0 %v1504
        %1609 = vmatmul.bf16.gmra.mxu0 %v1339
        %v1610 = vpop.f32.mrf.mxu0
        %v1611 = vadd.f32 %v1592, %v1610
        %v1612 = vpop.f32.mrf.mxu0
        %v1613 = vadd.f32 %v1594, %v1612
        %1614 = vmatmul.bf16.gmra.mxu0 %v1343
        %v1615 = vpop.f32.mrf.mxu0
        %v1616 = vadd.f32 %v1597, %v1615
        %v1617 = vpop.f32.mrf.mxu0
        %v1618 = vadd.f32 %v1599, %v1617
        %1619 = vdwg.mxu0
        %vm1620 = vcmask 261120
        %v1621 = vsel %vm1620, %v1611, -inf
        %v1622 = vrot.slane %v1621, 4
        %v1623 = vmax.f32 %v1621, %v1622
        %v1624 = vrot.slane %v1623, 2
        %v1625 = vmax.f32 %v1623, %v1624
        %v1626 = vrot.slane %v1625, 1
        %v1627 = vmax.f32 %v1625, %v1626
        %v1628 = vsel %vm1620, %v1613, -inf
        %v1629 = vrot.slane %v1628, 4
        %v1630 = vmax.f32 %v1628, %v1629
        %v1631 = vrot.slane %v1630, 2
        %v1632 = vmax.f32 %v1630, %v1631
        %v1633 = vrot.slane %v1632, 1
        %v1634 = vmax.f32 %v1632, %v1633
        %v1635 = vsel %vm1620, %v1616, -inf
        %v1636 = vrot.slane %v1635, 4
        %v1637 = vmax.f32 %v1635, %v1636
        %v1638 = vrot.slane %v1637, 2
        %v1639 = vmax.f32 %v1637, %v1638
        %v1640 = vrot.slane %v1639, 1
        %v1641 = vmax.f32 %v1639, %v1640
        %v1642 = vsel %vm1620, %v1618, -inf
        %v1643 = vrot.slane %v1642, 4
        %v1644 = vmax.f32 %v1642, %v1643
        %v1645 = vrot.slane %v1644, 2
        %v1646 = vmax.f32 %v1644, %v1645
        %v1647 = vrot.slane %v1646, 1
        %v1648 = vmax.f32 %v1646, %v1647
        %v1649 = vld [vmem:[%s6] sm:$0x1]
        %v1651 = vperm.slane %v1649, 0
        %v1653 = vadd.f32 %v1627, %v1651
        %v1654 = vadd.f32 %v1634, %v1651
        %v1655 = vadd.f32 %v1641, %v1651
        %v1656 = vadd.f32 %v1648, %v1651
        %v1657 = vmax.f32 %v1653, 0.0
        %v1658 = vmax.f32 %v1654, 0.0
        %v1659 = vmax.f32 %v1655, 0.0
        %v1660 = vmax.f32 %v1656, 0.0
        %1661 = vst [vmem:[#allocation5] sm:$0xff] 0.0
        %1662 = vst [vmem:[#allocation5 + $0x9] sm:$0xff] 0.0
        %1663 = vst [vmem:[#allocation5 + $0x11] sm:$0x7] 0.0
        %v1668 = vrot.slane %v1658, 7
        %vm1669 = vcmask 1041409
        %v1670 = vsel %vm1669, %v1668, %v1657
        %v1671 = vrot.slane %v1659, 6
        %vm1672 = vcmask 1042434
        %v1673 = vsel %vm1672, %v1671, %v1670
        %v1674 = vrot.slane %v1660, 5
        %vm1675 = vcmask 1043459
        %v1676 = vsel %vm1675, %v1674, %v1673
        %vm1678 = vcmask 257024
        %1679 = vst.msk [vmem:[#allocation5 + $0x8] sm:$0xf] %vm1678, %v1676
        %1680 = vrot.lane.b32.xlu0 %v1676, 32
        %v1681 = vpop.permute.xlu0 %1680
        %vm1683 = vcmask 519424
        %1684 = vst.msk [vmem:[#allocation5 + $0x7] sm:$0xf] %vm1683, %v1681
        %1685 = vrot.lane.b32.xlu0 %v1676, 64
        %v1686 = vpop.permute.xlu0 %1685
        %vm1688 = vcmask 781824
        %1689 = vst.msk [vmem:[#allocation5 + $0x6] sm:$0xf] %vm1688, %v1686
        %1690 = vrot.lane.b32.xlu0 %v1676, 96
        %v1691 = vpop.permute.xlu0 %1690
        %vm1693 = vcmask 1044224
        %1694 = vst.msk [vmem:[#allocation5 + $0x5] sm:$0xf] %vm1693, %v1691
        %v1695 = vld [vmem:[#allocation5] ss:$2 sm:$0x7]
        %1696 = vst [vmem:[#allocation6] sm:$0x7] %v1695
        %s1697 = scalar_lea.vmem [#allocation5], 4
        %v1698 = vld [vmem:[%s1697] ss:$2 sm:$0x7]
        %1699 = vst [vmem:[#allocation6 + $0x4] sm:$0x7] %v1698
        %s1700 = scalar_lea.vmem [#allocation5], 8
        %v1701 = vld [vmem:[%s1700] ss:$2 sm:$0x7]
        %1702 = vst [vmem:[#allocation6 + $0x8] sm:$0x7] %v1701
        %s1703 = scalar_lea.vmem [#allocation5], 12
        %v1704 = vld [vmem:[%s1703] ss:$2 sm:$0x7]
        %1705 = vst [vmem:[#allocation6 + $0xc] sm:$0x7] %v1704
        %v1706 = vld [vmem:[#allocation6] sm:$0x77]
        %v1707 = vld [vmem:[#allocation6 + $0x8] sm:$0x77]
        %1710 = vst [vmem:[#allocation1] ss:$2 sm:$0xff] %v1706
        %s1711 = scalar_lea.vmem [#allocation1], 16
        %1712 = vst [vmem:[%s1711] ss:$2 sm:$0xff] %v1707
        %v1713 = vld.sshfl [vmem:[#allocation1] sm:$0xff pattern:$0x75316420]
        %v1714 = vld.sshfl [vmem:[#allocation1 + $0x8] sm:$0xff pattern:$0x75316420]
        %v1715 = vld.sshfl [vmem:[#allocation1 + $0x10] sm:$0xff pattern:$0x75316420]
        %v1716 = vld.sshfl [vmem:[#allocation1 + $0x18] sm:$0xff pattern:$0x75316420]
        %v1721 = vpack.c.bf16 %v1713, %v1713
        %v1722 = vpack.c.bf16 %v1714, %v1714
        %v1723 = vpack.c.bf16 %v1715, %v1715
        %v1724 = vpack.c.bf16 %v1716, %v1716
        %v1725 = vld [vmem:[#allocation11] sm:$0xf]
        %v1726 = vld [vmem:[#allocation11 + $0x4] sm:$0xf]
        %v1727 = vld [vmem:[#allocation11 + $0x8] sm:$0xf]
        %v1728 = vld [vmem:[#allocation11 + $0xc] sm:$0xf]
        %v1729 = vld [vmem:[#allocation11 + $0x10] sm:$0xf]
        %v1730 = vld [vmem:[#allocation11 + $0x14] sm:$0xf]
        %v1731 = vld [vmem:[#allocation11 + $0x18] sm:$0xf]
        %v1732 = vld [vmem:[#allocation11 + $0x1c] sm:$0xf]
        %v1733 = vld [vmem:[#allocation11 + $0x20] sm:$0xf]
        %v1734 = vld [vmem:[#allocation11 + $0x24] sm:$0xf]
        %v1735 = vld [vmem:[#allocation11 + $0x28] sm:$0xf]
        %v1736 = vld [vmem:[#allocation11 + $0x2c] sm:$0xf]
        %v1737 = vld [vmem:[#allocation11 + $0x30] sm:$0xf]
        %v1738 = vld [vmem:[#allocation11 + $0x34] sm:$0xf]
        %v1739 = vld [vmem:[#allocation11 + $0x38] sm:$0xf]
        %v1740 = vld [vmem:[#allocation11 + $0x3c] sm:$0xf]
        %v1741 = vld [vmem:[#allocation11 + $0x40] sm:$0xf]
        %v1742 = vld [vmem:[#allocation11 + $0x44] sm:$0xf]
        %v1743 = vld [vmem:[#allocation11 + $0x48] sm:$0xf]
        %v1744 = vld [vmem:[#allocation11 + $0x4c] sm:$0xf]
        %v1745 = vld [vmem:[#allocation11 + $0x50] sm:$0xf]
        %v1746 = vld [vmem:[#allocation11 + $0x54] sm:$0xf]
        %v1747 = vld [vmem:[#allocation11 + $0x58] sm:$0xf]
        %v1748 = vld [vmem:[#allocation11 + $0x5c] sm:$0xf]
        %v1749 = vld [vmem:[#allocation11 + $0x60] sm:$0xf]
        %v1750 = vld [vmem:[#allocation11 + $0x64] sm:$0xf]
        %v1751 = vld [vmem:[#allocation11 + $0x68] sm:$0xf]
        %v1752 = vld [vmem:[#allocation11 + $0x6c] sm:$0xf]
        %v1753 = vld [vmem:[#allocation11 + $0x70] sm:$0xf]
        %v1754 = vld [vmem:[#allocation11 + $0x74] sm:$0xf]
        %v1755 = vld [vmem:[#allocation11 + $0x78] sm:$0xf]
        %v1756 = vld [vmem:[#allocation11 + $0x7c] sm:$0xf]
        %v1757 = vld [vmem:[#allocation11 + $0x80] sm:$0xf]
        %v1758 = vld [vmem:[#allocation11 + $0x84] sm:$0xf]
        %v1759 = vld [vmem:[#allocation11 + $0x88] sm:$0xf]
        %v1760 = vld [vmem:[#allocation11 + $0x8c] sm:$0xf]
        %v1761 = vld [vmem:[#allocation11 + $0x90] sm:$0xf]
        %v1762 = vld [vmem:[#allocation11 + $0x94] sm:$0xf]
        %v1763 = vld [vmem:[#allocation11 + $0x98] sm:$0xf]
        %v1764 = vld [vmem:[#allocation11 + $0x9c] sm:$0xf]
        %v1765 = vld [vmem:[#allocation11 + $0xa0] sm:$0xf]
        %v1766 = vld [vmem:[#allocation11 + $0xa4] sm:$0xf]
        %v1767 = vld [vmem:[#allocation11 + $0xa8] sm:$0xf]
        %v1768 = vld [vmem:[#allocation11 + $0xac] sm:$0xf]
        %v1769 = vld [vmem:[#allocation11 + $0xb0] sm:$0xf]
        %v1770 = vld [vmem:[#allocation11 + $0xb4] sm:$0xf]
        %v1771 = vld [vmem:[#allocation11 + $0xb8] sm:$0xf]
        %v1772 = vld [vmem:[#allocation11 + $0xbc] sm:$0xf]
        %v1773 = vld [vmem:[#allocation11 + $0xc0] sm:$0xf]
        %v1774 = vld [vmem:[#allocation11 + $0xc4] sm:$0xf]
        %v1775 = vld [vmem:[#allocation11 + $0xc8] sm:$0xf]
        %v1776 = vld [vmem:[#allocation11 + $0xcc] sm:$0xf]
        %v1777 = vld [vmem:[#allocation11 + $0xd0] sm:$0xf]
        %v1778 = vld [vmem:[#allocation11 + $0xd4] sm:$0xf]
        %v1779 = vld [vmem:[#allocation11 + $0xd8] sm:$0xf]
        %v1780 = vld [vmem:[#allocation11 + $0xdc] sm:$0xf]
        %v1781 = vld [vmem:[#allocation11 + $0xe0] sm:$0xf]
        %v1782 = vld [vmem:[#allocation11 + $0xe4] sm:$0xf]
        %v1783 = vld [vmem:[#allocation11 + $0xe8] sm:$0xf]
        %v1784 = vld [vmem:[#allocation11 + $0xec] sm:$0xf]
        %v1785 = vld [vmem:[#allocation11 + $0xf0] sm:$0xf]
        %v1786 = vld [vmem:[#allocation11 + $0xf4] sm:$0xf]
        %v1787 = vld [vmem:[#allocation11 + $0xf8] sm:$0xf]
        %v1788 = vld [vmem:[#allocation11 + $0xfc] sm:$0xf]
        %v1789 = vld [vmem:[%s7] sm:$0x1]
        %v1791 = vperm.slane %v1789, 0
        %v1857 = vunpack.c.l.b16 %v1725
        %v1858 = vunpack.c.l.b16 %v1726
        %v1859 = vunpack.c.l.b16 %v1727
        %v1860 = vunpack.c.l.b16 %v1728
        %v1861 = vunpack.c.l.b16 %v1729
        %v1862 = vunpack.c.l.b16 %v1730
        %v1863 = vunpack.c.l.b16 %v1731
        %v1864 = vunpack.c.l.b16 %v1732
        %v1865 = vunpack.c.l.b16 %v1733
        %v1866 = vunpack.c.l.b16 %v1734
        %v1867 = vunpack.c.l.b16 %v1735
        %v1868 = vunpack.c.l.b16 %v1736
        %v1869 = vunpack.c.l.b16 %v1737
        %v1870 = vunpack.c.l.b16 %v1738
        %v1871 = vunpack.c.l.b16 %v1739
        %v1872 = vunpack.c.l.b16 %v1740
        %v1873 = vunpack.c.l.b16 %v1741
        %v1874 = vunpack.c.l.b16 %v1742
        %v1875 = vunpack.c.l.b16 %v1743
        %v1876 = vunpack.c.l.b16 %v1744
        %v1877 = vunpack.c.l.b16 %v1745
        %v1878 = vunpack.c.l.b16 %v1746
        %v1879 = vunpack.c.l.b16 %v1747
        %v1880 = vunpack.c.l.b16 %v1748
        %v1881 = vunpack.c.l.b16 %v1749
        %v1882 = vunpack.c.l.b16 %v1750
        %v1883 = vunpack.c.l.b16 %v1751
        %v1884 = vunpack.c.l.b16 %v1752
        %v1885 = vunpack.c.l.b16 %v1753
        %v1886 = vunpack.c.l.b16 %v1754
        %v1887 = vunpack.c.l.b16 %v1755
        %v1888 = vunpack.c.l.b16 %v1756
        %v1889 = vunpack.c.l.b16 %v1757
        %v1890 = vunpack.c.l.b16 %v1758
        %v1891 = vunpack.c.l.b16 %v1759
        %v1892 = vunpack.c.l.b16 %v1760
        %v1893 = vunpack.c.l.b16 %v1761
        %v1894 = vunpack.c.l.b16 %v1762
        %v1895 = vunpack.c.l.b16 %v1763
        %v1896 = vunpack.c.l.b16 %v1764
        %v1897 = vunpack.c.l.b16 %v1765
        %v1898 = vunpack.c.l.b16 %v1766
        %v1899 = vunpack.c.l.b16 %v1767
        %v1900 = vunpack.c.l.b16 %v1768
        %v1901 = vunpack.c.l.b16 %v1769
        %v1902 = vunpack.c.l.b16 %v1770
        %v1903 = vunpack.c.l.b16 %v1771
        %v1904 = vunpack.c.l.b16 %v1772
        %v1905 = vunpack.c.l.b16 %v1773
        %v1906 = vunpack.c.l.b16 %v1774
        %v1907 = vunpack.c.l.b16 %v1775
        %v1908 = vunpack.c.l.b16 %v1776
        %v1909 = vunpack.c.l.b16 %v1777
        %v1910 = vunpack.c.l.b16 %v1778
        %v1911 = vunpack.c.l.b16 %v1779
        %v1912 = vunpack.c.l.b16 %v1780
        %v1913 = vunpack.c.l.b16 %v1781
        %v1914 = vunpack.c.l.b16 %v1782
        %v1915 = vunpack.c.l.b16 %v1783
        %v1916 = vunpack.c.l.b16 %v1784
        %v1917 = vunpack.c.l.b16 %v1785
        %v1918 = vunpack.c.l.b16 %v1786
        %v1919 = vunpack.c.l.b16 %v1787
        %v1920 = vunpack.c.l.b16 %v1788
        %v1921 = vpack.c.b16 %v1858, %v1857
        %v1922 = vpack.c.b16 %v1860, %v1859
        %v1923 = vpack.c.b16 %v1862, %v1861
        %v1924 = vpack.c.b16 %v1864, %v1863
        %v1925 = vpack.c.b16 %v1866, %v1865
        %v1926 = vpack.c.b16 %v1868, %v1867
        %v1927 = vpack.c.b16 %v1870, %v1869
        %v1928 = vpack.c.b16 %v1872, %v1871
        %v1929 = vpack.c.b16 %v1874, %v1873
        %v1930 = vpack.c.b16 %v1876, %v1875
        %v1931 = vpack.c.b16 %v1878, %v1877
        %v1932 = vpack.c.b16 %v1880, %v1879
        %v1933 = vpack.c.b16 %v1882, %v1881
        %v1934 = vpack.c.b16 %v1884, %v1883
        %v1935 = vpack.c.b16 %v1886, %v1885
        %v1936 = vpack.c.b16 %v1888, %v1887
        %v1937 = vpack.c.b16 %v1890, %v1889
        %v1938 = vpack.c.b16 %v1892, %v1891
        %v1939 = vpack.c.b16 %v1894, %v1893
        %v1940 = vpack.c.b16 %v1896, %v1895
        %v1941 = vpack.c.b16 %v1898, %v1897
        %v1942 = vpack.c.b16 %v1900, %v1899
        %v1943 = vpack.c.b16 %v1902, %v1901
        %v1944 = vpack.c.b16 %v1904, %v1903
        %v1945 = vpack.c.b16 %v1906, %v1905
        %v1946 = vpack.c.b16 %v1908, %v1907
        %v1947 = vpack.c.b16 %v1910, %v1909
        %v1948 = vpack.c.b16 %v1912, %v1911
        %v1949 = vpack.c.b16 %v1914, %v1913
        %v1950 = vpack.c.b16 %v1916, %v1915
        %v1951 = vpack.c.b16 %v1918, %v1917
        %v1952 = vpack.c.b16 %v1920, %v1919
        %1985 = vmatpush.bf16.msra.mxu0 %v1928
        %1986 = vmatpush.bf16.msra.mxu0 %v1927
        %1987 = vmatpush.bf16.msra.mxu0 %v1926
        %1988 = vmatpush.bf16.msra.mxu0 %v1925
        %1989 = vmatpush.bf16.msra.mxu0 %v1924
        %1990 = vmatpush.bf16.msra.mxu0 %v1923
        %1991 = vmatpush.bf16.msra.mxu0 %v1922
        %1992 = vmatpush.bf16.msra.mxu0 %v1921
        %1993 = vmatmul.bf16.gmra.mxu0 %v1721
        %v1994 = vpop.f32.mrf.mxu0
        %v1995 = vadd.f32 %v1791, %v1994
        %v1996 = vpop.f32.mrf.mxu0
        %1997 = vdwg.mxu0
        %1998 = vmatpush.bf16.msra.mxu0 %v1936
        %1999 = vmatpush.bf16.msra.mxu0 %v1935
        %2000 = vmatpush.bf16.msra.mxu0 %v1934
        %2001 = vmatpush.bf16.msra.mxu0 %v1933
        %2002 = vmatpush.bf16.msra.mxu0 %v1932
        %2003 = vmatpush.bf16.msra.mxu0 %v1931
        %2004 = vmatpush.bf16.msra.mxu0 %v1930
        %2005 = vmatpush.bf16.msra.mxu0 %v1929
        %2006 = vmatmul.bf16.gmra.mxu0 %v1722
        %v2007 = vpop.f32.mrf.mxu0
        %v2008 = vadd.f32 %v1995, %v2007
        %v2009 = vpop.f32.mrf.mxu0
        %2010 = vdwg.mxu0
        %2011 = vmatpush.bf16.msra.mxu0 %v1944
        %2012 = vmatpush.bf16.msra.mxu0 %v1943
        %2013 = vmatpush.bf16.msra.mxu0 %v1942
        %2014 = vmatpush.bf16.msra.mxu0 %v1941
        %2015 = vmatpush.bf16.msra.mxu0 %v1940
        %2016 = vmatpush.bf16.msra.mxu0 %v1939
        %2017 = vmatpush.bf16.msra.mxu0 %v1938
        %2018 = vmatpush.bf16.msra.mxu0 %v1937
        %2019 = vmatmul.bf16.gmra.mxu0 %v1723
        %v2020 = vpop.f32.mrf.mxu0
        %v2021 = vadd.f32 %v2008, %v2020
        %v2022 = vpop.f32.mrf.mxu0
        %2023 = vdwg.mxu0
        %2024 = vmatpush.bf16.msra.mxu0 %v1952
        %2025 = vmatpush.bf16.msra.mxu0 %v1951
        %2026 = vmatpush.bf16.msra.mxu0 %v1950
        %2027 = vmatpush.bf16.msra.mxu0 %v1949
        %2028 = vmatpush.bf16.msra.mxu0 %v1948
        %2029 = vmatpush.bf16.msra.mxu0 %v1947
        %2030 = vmatpush.bf16.msra.mxu0 %v1946
        %2031 = vmatpush.bf16.msra.mxu0 %v1945
        %2032 = vmatmul.bf16.gmra.mxu0 %v1724
        %v2033 = vpop.f32.mrf.mxu0
        %v2034 = vadd.f32 %v2021, %v2033
        %v2035 = vpop.f32.mrf.mxu0
        %2036 = vdwg.mxu0
        %v2037 = vmax.f32 %v2034, 0.0
        %2038 = vst [vmem:[#allocation7] sm:$0xf] 0.0
        %2039 = vst [vmem:[#allocation7 + $0x6] sm:$0x1f] 0.0
        %vm2040 = vcmask 518144
        %2041 = vst.msk [vmem:[#allocation7 + $0x4] sm:$0x7] %vm2040, %v2037
        %2043 = vrot.lane.b32.xlu0 %v2037, 64
        %v2044 = vpop.permute.xlu0 %2043
        %vm2046 = vcmask 1042944
        %2047 = vst.msk [vmem:[#allocation7 + $0x3] sm:$0x7] %vm2046, %v2044
        %v2048 = vld [vmem:[#allocation7] ss:$2 sm:$0x3]
        %2049 = vst [vmem:[#allocation8] sm:$0x3] %v2048
        %s2050 = scalar_lea.vmem [#allocation7], 2
        %v2051 = vld [vmem:[%s2050] ss:$2 sm:$0x3]
        %2052 = vst [vmem:[#allocation8 + $0x2] sm:$0x3] %v2051
        %s2053 = scalar_lea.vmem [#allocation7], 4
        %v2054 = vld [vmem:[%s2053] ss:$2 sm:$0x3]
        %2055 = vst [vmem:[#allocation8 + $0x4] sm:$0x3] %v2054
        %s2056 = scalar_lea.vmem [#allocation7], 6
        %v2057 = vld [vmem:[%s2056] ss:$2 sm:$0x3]
        %2058 = vst [vmem:[#allocation8 + $0x6] sm:$0x3] %v2057
        %v2059 = vld [vmem:[#allocation8] sm:$0xff]
        %2061 = vst [vmem:[#allocation1] ss:$4 sm:$0xff] %v2059
        %v2062 = vld.sshfl [vmem:[#allocation1] sm:$0xff pattern:$0x73625140]
        %v2063 = vld.sshfl [vmem:[#allocation1 + $0x8] sm:$0xff pattern:$0x73625140]
        %v2064 = vld.sshfl [vmem:[#allocation1 + $0x10] sm:$0xff pattern:$0x73625140]
        %v2065 = vld.sshfl [vmem:[#allocation1 + $0x18] sm:$0xff pattern:$0x73625140]
        %v2070 = vpack.c.bf16 %v2062, %v2062
        %v2071 = vpack.c.bf16 %v2063, %v2063
        %v2072 = vpack.c.bf16 %v2064, %v2064
        %v2073 = vpack.c.bf16 %v2065, %v2065
        %v2074 = vld [vmem:[#allocation13] sm:$0xf]
        %v2075 = vld [vmem:[#allocation13 + $0x4] sm:$0xf]
        %v2076 = vld [vmem:[#allocation13 + $0x8] sm:$0xf]
        %v2077 = vld [vmem:[#allocation13 + $0xc] sm:$0xf]
        %v2078 = vld [vmem:[#allocation13 + $0x10] sm:$0xf]
        %v2079 = vld [vmem:[#allocation13 + $0x14] sm:$0xf]
        %v2080 = vld [vmem:[#allocation13 + $0x18] sm:$0xf]
        %v2081 = vld [vmem:[#allocation13 + $0x1c] sm:$0xf]
        %v2082 = vld [vmem:[#allocation13 + $0x20] sm:$0xf]
        %v2083 = vld [vmem:[#allocation13 + $0x24] sm:$0xf]
        %v2084 = vld [vmem:[#allocation13 + $0x28] sm:$0xf]
        %v2085 = vld [vmem:[#allocation13 + $0x2c] sm:$0xf]
        %v2086 = vld [vmem:[#allocation13 + $0x30] sm:$0xf]
        %v2087 = vld [vmem:[#allocation13 + $0x34] sm:$0xf]
        %v2088 = vld [vmem:[#allocation13 + $0x38] sm:$0xf]
        %v2089 = vld [vmem:[#allocation13 + $0x3c] sm:$0xf]
        %v2090 = vld [vmem:[#allocation13 + $0x40] sm:$0xf]
        %v2091 = vld [vmem:[#allocation13 + $0x44] sm:$0xf]
        %v2092 = vld [vmem:[#allocation13 + $0x48] sm:$0xf]
        %v2093 = vld [vmem:[#allocation13 + $0x4c] sm:$0xf]
        %v2094 = vld [vmem:[#allocation13 + $0x50] sm:$0xf]
        %v2095 = vld [vmem:[#allocation13 + $0x54] sm:$0xf]
        %v2096 = vld [vmem:[#allocation13 + $0x58] sm:$0xf]
        %v2097 = vld [vmem:[#allocation13 + $0x5c] sm:$0xf]
        %v2098 = vld [vmem:[#allocation13 + $0x60] sm:$0xf]
        %v2099 = vld [vmem:[#allocation13 + $0x64] sm:$0xf]
        %v2100 = vld [vmem:[#allocation13 + $0x68] sm:$0xf]
        %v2101 = vld [vmem:[#allocation13 + $0x6c] sm:$0xf]
        %v2102 = vld [vmem:[#allocation13 + $0x70] sm:$0xf]
        %v2103 = vld [vmem:[#allocation13 + $0x74] sm:$0xf]
        %v2104 = vld [vmem:[#allocation13 + $0x78] sm:$0xf]
        %v2105 = vld [vmem:[#allocation13 + $0x7c] sm:$0xf]
        %v2106 = vld [vmem:[#allocation13 + $0x80] sm:$0xf]
        %v2107 = vld [vmem:[#allocation13 + $0x84] sm:$0xf]
        %v2108 = vld [vmem:[#allocation13 + $0x88] sm:$0xf]
        %v2109 = vld [vmem:[#allocation13 + $0x8c] sm:$0xf]
        %v2110 = vld [vmem:[#allocation13 + $0x90] sm:$0xf]
        %v2111 = vld [vmem:[#allocation13 + $0x94] sm:$0xf]
        %v2112 = vld [vmem:[#allocation13 + $0x98] sm:$0xf]
        %v2113 = vld [vmem:[#allocation13 + $0x9c] sm:$0xf]
        %v2114 = vld [vmem:[#allocation13 + $0xa0] sm:$0xf]
        %v2115 = vld [vmem:[#allocation13 + $0xa4] sm:$0xf]
        %v2116 = vld [vmem:[#allocation13 + $0xa8] sm:$0xf]
        %v2117 = vld [vmem:[#allocation13 + $0xac] sm:$0xf]
        %v2118 = vld [vmem:[#allocation13 + $0xb0] sm:$0xf]
        %v2119 = vld [vmem:[#allocation13 + $0xb4] sm:$0xf]
        %v2120 = vld [vmem:[#allocation13 + $0xb8] sm:$0xf]
        %v2121 = vld [vmem:[#allocation13 + $0xbc] sm:$0xf]
        %v2122 = vld [vmem:[#allocation13 + $0xc0] sm:$0xf]
        %v2123 = vld [vmem:[#allocation13 + $0xc4] sm:$0xf]
        %v2124 = vld [vmem:[#allocation13 + $0xc8] sm:$0xf]
        %v2125 = vld [vmem:[#allocation13 + $0xcc] sm:$0xf]
        %v2126 = vld [vmem:[#allocation13 + $0xd0] sm:$0xf]
        %v2127 = vld [vmem:[#allocation13 + $0xd4] sm:$0xf]
        %v2128 = vld [vmem:[#allocation13 + $0xd8] sm:$0xf]
        %v2129 = vld [vmem:[#allocation13 + $0xdc] sm:$0xf]
        %v2130 = vld [vmem:[#allocation13 + $0xe0] sm:$0xf]
        %v2131 = vld [vmem:[#allocation13 + $0xe4] sm:$0xf]
        %v2132 = vld [vmem:[#allocation13 + $0xe8] sm:$0xf]
        %v2133 = vld [vmem:[#allocation13 + $0xec] sm:$0xf]
        %v2134 = vld [vmem:[#allocation13 + $0xf0] sm:$0xf]
        %v2135 = vld [vmem:[#allocation13 + $0xf4] sm:$0xf]
        %v2136 = vld [vmem:[#allocation13 + $0xf8] sm:$0xf]
        %v2137 = vld [vmem:[#allocation13 + $0xfc] sm:$0xf]
        %v2138 = vld [vmem:[%s8] sm:$0x1]
        %v2140 = vperm.slane %v2138, 0
        %v2206 = vunpack.c.l.b16 %v2074
        %v2207 = vunpack.c.l.b16 %v2075
        %v2208 = vunpack.c.l.b16 %v2076
        %v2209 = vunpack.c.l.b16 %v2077
        %v2210 = vunpack.c.l.b16 %v2078
        %v2211 = vunpack.c.l.b16 %v2079
        %v2212 = vunpack.c.l.b16 %v2080
        %v2213 = vunpack.c.l.b16 %v2081
        %v2214 = vunpack.c.l.b16 %v2082
        %v2215 = vunpack.c.l.b16 %v2083
        %v2216 = vunpack.c.l.b16 %v2084
        %v2217 = vunpack.c.l.b16 %v2085
        %v2218 = vunpack.c.l.b16 %v2086
        %v2219 = vunpack.c.l.b16 %v2087
        %v2220 = vunpack.c.l.b16 %v2088
        %v2221 = vunpack.c.l.b16 %v2089
        %v2222 = vunpack.c.l.b16 %v2090
        %v2223 = vunpack.c.l.b16 %v2091
        %v2224 = vunpack.c.l.b16 %v2092
        %v2225 = vunpack.c.l.b16 %v2093
        %v2226 = vunpack.c.l.b16 %v2094
        %v2227 = vunpack.c.l.b16 %v2095
        %v2228 = vunpack.c.l.b16 %v2096
        %v2229 = vunpack.c.l.b16 %v2097
        %v2230 = vunpack.c.l.b16 %v2098
        %v2231 = vunpack.c.l.b16 %v2099
        %v2232 = vunpack.c.l.b16 %v2100
        %v2233 = vunpack.c.l.b16 %v2101
        %v2234 = vunpack.c.l.b16 %v2102
        %v2235 = vunpack.c.l.b16 %v2103
        %v2236 = vunpack.c.l.b16 %v2104
        %v2237 = vunpack.c.l.b16 %v2105
        %v2238 = vunpack.c.l.b16 %v2106
        %v2239 = vunpack.c.l.b16 %v2107
        %v2240 = vunpack.c.l.b16 %v2108
        %v2241 = vunpack.c.l.b16 %v2109
        %v2242 = vunpack.c.l.b16 %v2110
        %v2243 = vunpack.c.l.b16 %v2111
        %v2244 = vunpack.c.l.b16 %v2112
        %v2245 = vunpack.c.l.b16 %v2113
        %v2246 = vunpack.c.l.b16 %v2114
        %v2247 = vunpack.c.l.b16 %v2115
        %v2248 = vunpack.c.l.b16 %v2116
        %v2249 = vunpack.c.l.b16 %v2117
        %v2250 = vunpack.c.l.b16 %v2118
        %v2251 = vunpack.c.l.b16 %v2119
        %v2252 = vunpack.c.l.b16 %v2120
        %v2253 = vunpack.c.l.b16 %v2121
        %v2254 = vunpack.c.l.b16 %v2122
        %v2255 = vunpack.c.l.b16 %v2123
        %v2256 = vunpack.c.l.b16 %v2124
        %v2257 = vunpack.c.l.b16 %v2125
        %v2258 = vunpack.c.l.b16 %v2126
        %v2259 = vunpack.c.l.b16 %v2127
        %v2260 = vunpack.c.l.b16 %v2128
        %v2261 = vunpack.c.l.b16 %v2129
        %v2262 = vunpack.c.l.b16 %v2130
        %v2263 = vunpack.c.l.b16 %v2131
        %v2264 = vunpack.c.l.b16 %v2132
        %v2265 = vunpack.c.l.b16 %v2133
        %v2266 = vunpack.c.l.b16 %v2134
        %v2267 = vunpack.c.l.b16 %v2135
        %v2268 = vunpack.c.l.b16 %v2136
        %v2269 = vunpack.c.l.b16 %v2137
        %v2270 = vpack.c.b16 %v2207, %v2206
        %v2271 = vpack.c.b16 %v2209, %v2208
        %v2272 = vpack.c.b16 %v2211, %v2210
        %v2273 = vpack.c.b16 %v2213, %v2212
        %v2274 = vpack.c.b16 %v2215, %v2214
        %v2275 = vpack.c.b16 %v2217, %v2216
        %v2276 = vpack.c.b16 %v2219, %v2218
        %v2277 = vpack.c.b16 %v2221, %v2220
        %v2278 = vpack.c.b16 %v2223, %v2222
        %v2279 = vpack.c.b16 %v2225, %v2224
        %v2280 = vpack.c.b16 %v2227, %v2226
        %v2281 = vpack.c.b16 %v2229, %v2228
        %v2282 = vpack.c.b16 %v2231, %v2230
        %v2283 = vpack.c.b16 %v2233, %v2232
        %v2284 = vpack.c.b16 %v2235, %v2234
        %v2285 = vpack.c.b16 %v2237, %v2236
        %v2286 = vpack.c.b16 %v2239, %v2238
        %v2287 = vpack.c.b16 %v2241, %v2240
        %v2288 = vpack.c.b16 %v2243, %v2242
        %v2289 = vpack.c.b16 %v2245, %v2244
        %v2290 = vpack.c.b16 %v2247, %v2246
        %v2291 = vpack.c.b16 %v2249, %v2248
        %v2292 = vpack.c.b16 %v2251, %v2250
        %v2293 = vpack.c.b16 %v2253, %v2252
        %v2294 = vpack.c.b16 %v2255, %v2254
        %v2295 = vpack.c.b16 %v2257, %v2256
        %v2296 = vpack.c.b16 %v2259, %v2258
        %v2297 = vpack.c.b16 %v2261, %v2260
        %v2298 = vpack.c.b16 %v2263, %v2262
        %v2299 = vpack.c.b16 %v2265, %v2264
        %v2300 = vpack.c.b16 %v2267, %v2266
        %v2301 = vpack.c.b16 %v2269, %v2268
        %2334 = vmatpush.bf16.msra.mxu0 %v2277
        %2335 = vmatpush.bf16.msra.mxu0 %v2276
        %2336 = vmatpush.bf16.msra.mxu0 %v2275
        %2337 = vmatpush.bf16.msra.mxu0 %v2274
        %2338 = vmatpush.bf16.msra.mxu0 %v2273
        %2339 = vmatpush.bf16.msra.mxu0 %v2272
        %2340 = vmatpush.bf16.msra.mxu0 %v2271
        %2341 = vmatpush.bf16.msra.mxu0 %v2270
        %2342 = vmatmul.bf16.gmra.mxu0 %v2070
        %v2343 = vpop.f32.mrf.mxu0
        %v2344 = vadd.f32 %v2140, %v2343
        %v2345 = vpop.f32.mrf.mxu0
        %2346 = vdwg.mxu0
        %2347 = vmatpush.bf16.msra.mxu0 %v2285
        %2348 = vmatpush.bf16.msra.mxu0 %v2284
        %2349 = vmatpush.bf16.msra.mxu0 %v2283
        %2350 = vmatpush.bf16.msra.mxu0 %v2282
        %2351 = vmatpush.bf16.msra.mxu0 %v2281
        %2352 = vmatpush.bf16.msra.mxu0 %v2280
        %2353 = vmatpush.bf16.msra.mxu0 %v2279
        %2354 = vmatpush.bf16.msra.mxu0 %v2278
        %2355 = vmatmul.bf16.gmra.mxu0 %v2071
        %v2356 = vpop.f32.mrf.mxu0
        %v2357 = vadd.f32 %v2344, %v2356
        %v2358 = vpop.f32.mrf.mxu0
        %2359 = vdwg.mxu0
        %2360 = vmatpush.bf16.msra.mxu0 %v2293
        %2361 = vmatpush.bf16.msra.mxu0 %v2292
        %2362 = vmatpush.bf16.msra.mxu0 %v2291
        %2363 = vmatpush.bf16.msra.mxu0 %v2290
        %2364 = vmatpush.bf16.msra.mxu0 %v2289
        %2365 = vmatpush.bf16.msra.mxu0 %v2288
        %2366 = vmatpush.bf16.msra.mxu0 %v2287
        %2367 = vmatpush.bf16.msra.mxu0 %v2286
        %2368 = vmatmul.bf16.gmra.mxu0 %v2072
        %v2369 = vpop.f32.mrf.mxu0
        %v2370 = vadd.f32 %v2357, %v2369
        %v2371 = vpop.f32.mrf.mxu0
        %2372 = vdwg.mxu0
        %2373 = vmatpush.bf16.msra.mxu0 %v2301
        %2374 = vmatpush.bf16.msra.mxu0 %v2300
        %2375 = vmatpush.bf16.msra.mxu0 %v2299
        %2376 = vmatpush.bf16.msra.mxu0 %v2298
        %2377 = vmatpush.bf16.msra.mxu0 %v2297
        %2378 = vmatpush.bf16.msra.mxu0 %v2296
        %2379 = vmatpush.bf16.msra.mxu0 %v2295
        %2380 = vmatpush.bf16.msra.mxu0 %v2294
        %2381 = vmatmul.bf16.gmra.mxu0 %v2073
        %v2382 = vpop.f32.mrf.mxu0
        %v2383 = vadd.f32 %v2370, %v2382
        %v2384 = vpop.f32.mrf.mxu0
        %2385 = vdwg.mxu0
        %v2386 = vmax.f32 %v2383, 0.0
        %2387 = vst [vmem:[%s380] sm:$0x3] %v2386
        %p2388 = scmp.lt.s32.totalorder %s22, 1
        %s2389 = scalar_select %p2388, %s22, 1
        %s2390 = smul.addr %s2389, 2
        %s2391 = scalar_lea.vmem %s9, %s2390
        // Predicated region
        $region69: #{_lambda_.1} parent=55 // pred_check
          %p2392 = pneg %p234
        $region70: #{_lambda_.1} parent=55 // pred_check_branch
          %2394 = sbr.rel (%p2392) target = $region72
        $region71: #{_lambda_.1} parent=55 // pred_region
          _
        $region72: #{_lambda_.1} parent=55 // pred_fallthru
          _
      $region56: #{_lambda_.1} parent=5 // pred_fallthru
        _
      %p2395 = scmp.le.s32.totalorder 2, %s17
      // Predicated region
      $region73: #{_lambda_.1} parent=5 // pred_check
        %p2396 = pneg %p2395
      $region74: #{_lambda_.1} parent=5 // pred_check_branch
        %2398 = sbr.rel (%p2396) target = $region76
      $region75: #{_lambda_.1} parent=5 // pred_region
        %s2399 = ssub.s32 %s17, 2
        // Predicated region
        $region77: #{_lambda_.1} parent=75 // pred_check
          %p2400 = pneg %p240
        $region78: #{_lambda_.1} parent=75 // pred_check_branch
          %2402 = sbr.rel (%p2400) target = $region80
        $region79: #{_lambda_.1} parent=75 // pred_region
          %p2403 = scmp.lt.s32.totalorder %s23, 1
          %s2404 = scalar_select %p2403, %s23, 1
          %s2405 = smul.addr %s2404, 2
          %s2406 = scalar_lea.vmem %s9, %s2405
        $region80: #{_lambda_.1} parent=75 // pred_fallthru
          _
      $region76: #{_lambda_.1} parent=5 // pred_fallthru
        _
    $region6: #{_lambda_.1} parent=1 // loop_footer
      %s21 = sadd.s32 1, %s17
    $region7: #{_lambda_.1} parent=1 // loop_footer_branch
      %16 = sbr.rel target = $region3
    $region8: #{_lambda_.1} parent=1 // loop_exit
      _
    %2407 = vsyncpa [#allocation10], 1
    %s2408 = scalar_lea.sflag [#allocation10], 1
    %2409 = vsyncpa %s2408, 1
    %2410 = vsyncpa [#allocation12], 1

</llo_original>
